<compile_context>
chip_gen: v6e
topology: v6e:2x2x1
jax: 0.10.0
libtpu: 0.0.40
codegen_flags: <defaults>
</compile_context>

<pallas_src>
import functools

import jax
import jax.numpy as jnp
from jax.experimental import pallas as pl
from jax.experimental.pallas import tpu as pltpu

HIDDEN = 512   # BERT hidden size implied by nn.Linear(512, 768)
OUT = 768      # fc_out output features


def _round_up(x, m):
    return ((x + m - 1) // m) * m


# ----------------------------- Pallas kernel --------------------------------
def mean_pool_linear_kernel(h_ref, w_ref, b_ref, o_ref, acc_ref, *,
                            inv_seq_len, seq_len, ts, needs_seq_mask):
    # h_ref:   (tb, ts, H) activation chunk for this (batch tile, seq chunk)
    # w_ref:   (H, OUT)    fc weight (grid-invariant, VMEM resident)
    # b_ref:   (1, OUT)    fc bias (f32, grid-invariant)
    # o_ref:   (tb, OUT)   output tile (written on last reduction step)
    # acc_ref: (tb, H)     f32 partial-sum accumulator (VMEM scratch)
    k = pl.program_id(1)

    @pl.when(k == 0)
    def _init():
        acc_ref[...] = jnp.zeros_like(acc_ref)

    h = h_ref[...]
    if needs_seq_mask:
        # Ragged last seq chunk: zero out positions >= S instead of padding HBM.
        seq_pos = k * ts + jax.lax.broadcasted_iota(jnp.int32, (1, ts, 1), 1)
        h = jnp.where(seq_pos < seq_len, h, jnp.zeros((), h.dtype))

    # Chunked sequence sum with f32 accumulation (works for f32 or bf16 activations).
    acc_ref[...] += jnp.sum(h, axis=1, dtype=jnp.float32)

    @pl.when(k == pl.num_programs(1) - 1)
    def _finalize():
        pooled = (acc_ref[...] * inv_seq_len).astype(w_ref.dtype)   # 1/S folded here
        out = jnp.dot(pooled, w_ref[...],
                      preferred_element_type=jnp.float32)           # (tb, OUT) on MXU
        o_ref[...] = (out + b_ref[...]).astype(o_ref.dtype)


# ------------------------------ host wrapper ---------------------------------
def apacl_head(last_hidden_state, w_fc, b_fc, *, matmul_dtype=None,
               tb=None, ts=None, vmem_budget_bytes=8 << 20):
    """Fused mean-pool (over seq) + Linear(512 -> 768), tiled over batch & sequence."""
    B, S, H = last_hidden_state.shape
    assert H == HIDDEN and w_fc.shape == (HIDDEN, OUT) and b_fc.shape == (OUT,)

    # Per perf review: never cast the activations here (that is an extra full
    # HBM read+write pass). Only the small weight is cast; the pooled (tb, H)
    # vector is cast in-kernel at finalize to match the weight dtype.
    if matmul_dtype is not None:
        w_fc = w_fc.astype(matmul_dtype)

    act_itemsize = jnp.dtype(last_hidden_state.dtype).itemsize
    w_itemsize = jnp.dtype(w_fc.dtype).itemsize
    # bf16 packs two rows per sublane -> 16-row-aligned seq chunks; f32 -> 8.
    align = 16 if act_itemsize == 2 else 8

    # Batch tile: sublane-aligned (>=8), <=128 rows per MXU pass, and >=2 tiles
    # whenever possible so v7x's two TensorCores both get work on the parallel axis.
    b_ceil = _round_up(B, 8)
    if tb is None:
        tb = min(128, b_ceil)
        if b_ceil >= 16:
            tb = min(tb, _round_up(b_ceil // 2, 8))

    # Sequence chunk: largest aligned divisor of S fitting the per-buffer budget;
    # if none exists, take an aligned cap and mask the ragged tail in-kernel.
    if ts is None:
        ts_cap = max(align,
                     (vmem_budget_bytes // (tb * H * act_itemsize)) // align * align)
        ts = None
        t = align
        while t <= min(ts_cap, S):
            if S % t == 0:
                ts = t
            t += align
        if ts is None:
            ts = min(_round_up(S, align), ts_cap)
    needs_seq_mask = (S % ts) != 0

    grid = (pl.cdiv(B, tb), pl.cdiv(S, ts))

    # VMEM plan: 2 activation buffers + weight (x2 in the fallback path) + bias
    # + double-buffered output + f32 accumulator, plus headroom. Clamp to 48 MiB
    # so the limit is valid on v7x's 64 MiB VMEM as well as v5e/v6e's 128 MiB.
    act_block = tb * ts * H * act_itemsize
    w_bytes = HIDDEN * OUT * w_itemsize
    vmem_needed = (2 * act_block + 2 * w_bytes + OUT * 4
                   + 2 * tb * OUT * 4 + tb * HIDDEN * 4)
    vmem_limit = int(min(max(vmem_needed + (4 << 20), 32 << 20), 48 << 20))

    b2d = b_fc.reshape(1, OUT).astype(jnp.float32)
    kernel = functools.partial(
        mean_pool_linear_kernel, inv_seq_len=1.0 / S, seq_len=S, ts=ts,
        needs_seq_mask=needs_seq_mask)

    cost = pl.CostEstimate(
        flops=2 * B * HIDDEN * OUT + B * S * HIDDEN,
        transcendentals=0,
        bytes_accessed=B * S * HIDDEN * act_itemsize + w_bytes + B * OUT * 4 + OUT * 4)

    def _call(single_buffer_resident):
        resident_kwargs = (
            dict(pipeline_mode=pl.Buffered(1)) if single_buffer_resident else {})
        grid_spec = pltpu.PrefetchScalarGridSpec(
            num_scalar_prefetch=0,
            grid=grid,                                   # (batch tiles, seq chunks)
            in_specs=[
                pl.BlockSpec((tb, ts, H), lambda i, k: (i, k, 0)),
                pl.BlockSpec((HIDDEN, OUT), lambda i, k: (0, 0), **resident_kwargs),
                pl.BlockSpec((1, OUT), lambda i, k: (0, 0), **resident_kwargs),
            ],
            out_specs=pl.BlockSpec((tb, OUT), lambda i, k: (i, 0)),
            scratch_shapes=[pltpu.VMEM((tb, HIDDEN), jnp.float32)],
        )
        return pl.pallas_call(
            kernel,
            out_shape=jax.ShapeDtypeStruct((B, OUT), jnp.float32),
            grid_spec=grid_spec,
            compiler_params=pltpu.CompilerParams(
                dimension_semantics=("parallel", "arbitrary"),
                vmem_limit_bytes=vmem_limit),
            cost_estimate=cost,
        )(last_hidden_state, w_fc, b2d)

    try:
        # Grid-invariant weight/bias: single-buffered (VMEM resident, no
        # double-buffer copy) — frees ~1.5 MiB, mainly useful under v7x's 64 MiB.
        return _call(True)
    except Exception:
        # TODO(synk): drop this fallback once pipeline_mode=pl.Buffered(1) is
        # universally supported; behavior is identical, weight just gets 2 buffers.
        return _call(False)


# --------------------- synthetic stand-in for Bertmodel ---------------------
def synthetic_bert_last_hidden_state(params, input_ids, attention_mask, token_type_ids):
    # Deterministic embedding-style encoder producing (B, S, HIDDEN).
    # attention_mask is accepted for interface parity but unused here.
    del attention_mask
    B, S = input_ids.shape
    word = params["word_emb"][input_ids]                       # (B, S, H)
    pos = params["pos_emb"][:S][None, :, :]                    # (1, S, H)
    ttype = params["type_emb"][token_type_ids]                 # (B, S, H)
    h = word + pos + ttype
    mu = h.mean(-1, keepdims=True)
    var = ((h - mu) ** 2).mean(-1, keepdims=True)
    return (h - mu) * jax.lax.rsqrt(var + 1e-12)


# ----------------------------- reference (JAX) -------------------------------
def reference_forward(last_hidden_state, w_fc, b_fc):
    pooled = last_hidden_state.astype(jnp.float32).mean(axis=1)
    return jnp.dot(pooled, w_fc, precision=jax.lax.Precision.HIGHEST) + b_fc


# ---------------------------------- main -------------------------------------
if __name__ == "__main__":
    key = jax.random.PRNGKey(0)
    (k_word, k_pos, k_type, k_w, k_b,
     k_ids1, k_tt1, k_ids2, k_tt2) = jax.random.split(key, 9)

    VOCAB, S_MAX = 100, 24
    params = {
        "word_emb": jax.random.normal(k_word, (VOCAB, HIDDEN), jnp.float32) * 0.02,
        "pos_emb": jax.random.normal(k_pos, (S_MAX, HIDDEN), jnp.float32) * 0.02,
        "type_emb": jax.random.normal(k_type, (2, HIDDEN), jnp.float32) * 0.02,
    }
    # nn.Linear(512, 768): torch weight is (768, 512); stored transposed as (512, 768).
    w_fc = jax.random.normal(k_w, (HIDDEN, OUT), jnp.float32) * 0.02
    b_fc = jax.random.normal(k_b, (OUT,), jnp.float32) * 0.02

    # ---- Test 1: spec-sized tiny inputs (B=2, S=8), f32 path -----------------
    B1, S1 = 2, 8
    input_ids = jax.random.randint(k_ids1, (B1, S1), 0, VOCAB, jnp.int32)
    attention_mask = jnp.ones((B1, S1), jnp.int32)
    token_type_ids = jax.random.randint(k_tt1, (B1, S1), 0, 2, jnp.int32)
    h1 = synthetic_bert_last_hidden_state(params, input_ids, attention_mask, token_type_ids)
    ref1 = reference_forward(h1, w_fc, b_fc)
    out1 = jax.block_until_ready(apacl_head(h1, w_fc, b_fc))
    assert out1.shape == (B1, OUT)
    assert jnp.allclose(out1, ref1, atol=5e-3, rtol=5e-3), "f32 path mismatch vs reference"

    # ---- Test 2: ragged batch/seq, multi-chunk reduction, bf16 MXU path ------
    B2, S2 = 5, 24
    ids2 = jax.random.randint(k_ids2, (B2, S2), 0, VOCAB, jnp.int32)
    mask2 = jnp.ones((B2, S2), jnp.int32)
    tt2 = jax.random.randint(k_tt2, (B2, S2), 0, 2, jnp.int32)
    h2 = synthetic_bert_last_hidden_state(params, ids2, mask2, tt2)
    ref2 = reference_forward(h2, w_fc, b_fc)
    # bf16 activations as if emitted by an upstream bf16 encoder (cast here only to
    # build the test input; the kernel wrapper itself never casts activations).
    out2 = jax.block_until_ready(
        apacl_head(h2.astype(jnp.bfloat16), w_fc, b_fc,
                   matmul_dtype=jnp.bfloat16, ts=16))
    assert out2.shape == (B2, OUT)
    assert jnp.allclose(out2, ref2, atol=3e-2, rtol=3e-2), "bf16 path mismatch vs reference"

    print("KERNEL_OK")
</pallas_src>

<mosaic_0001>
module attributes {stable_mosaic.version = 11 : i64} {
  func.func @mean_pool_linear_kernel(%arg0: i32, %arg1: i32, %arg2: memref<8x8x512xf32, #tpu.memory_space<vmem>>, %arg3: memref<512x768xf32, #tpu.memory_space<vmem>>, %arg4: memref<1x768xf32, #tpu.memory_space<vmem>>, %arg5: memref<8x768xf32, #tpu.memory_space<vmem>>, %arg6: memref<8x512xf32, #tpu.memory_space<vmem>>) attributes {dimension_semantics = [#tpu.dimension_semantics<parallel>, #tpu.dimension_semantics<arbitrary>], iteration_bounds = array<i64: 1, 1>, scalar_prefetch = 0 : i64, scratch_operands = 1 : i64, tpu.core_type = #tpu.core_type<tc>, window_params = [{transform_indices = @transform_0, window_bounds = array<i64: 8, 8, 512>}, {pipeline_mode = #tpu.pipeline_mode<synchronous>, transform_indices = @transform_1, window_bounds = array<i64: 512, 768>}, {pipeline_mode = #tpu.pipeline_mode<synchronous>, transform_indices = @transform_2, window_bounds = array<i64: 1, 768>}, {transform_indices = @transform_3, window_bounds = array<i64: 8, 768>}]} {
    %c0_i32 = arith.constant 0 : i32
    %0 = arith.cmpi eq, %arg1, %c0_i32 : i32
    %1 = arith.extui %0 : i1 to i32
    %c0_i32_0 = arith.constant 0 : i32
    %2 = arith.cmpi ne, %1, %c0_i32_0 : i32
    scf.if %2 {
      %cst_9 = arith.constant 0.000000e+00 : f32
      %11 = vector.broadcast %cst_9 : f32 to vector<8x512xf32>
      %c0_10 = arith.constant 0 : index
      %c0_11 = arith.constant 0 : index
      %12 = vector.load %arg6[%c0_10, %c0_11] : memref<8x512xf32, #tpu.memory_space<vmem>>, vector<8x512xf32>
      tpu.vector_store %arg6[%c0_10, %c0_11], %11 {strides = array<i32>} : memref<8x512xf32, #tpu.memory_space<vmem>>, vector<8x512xf32>,
    } else {
    }
    %c0 = arith.constant 0 : index
    %c0_1 = arith.constant 0 : index
    %c0_2 = arith.constant 0 : index
    %3 = vector.load %arg2[%c0, %c0_1, %c0_2] : memref<8x8x512xf32, #tpu.memory_space<vmem>>, vector<8x8x512xf32>
    %c0_3 = arith.constant 0 : index
    %c0_4 = arith.constant 0 : index
    %4 = vector.load %arg6[%c0_3, %c0_4] : memref<8x512xf32, #tpu.memory_space<vmem>>, vector<8x512xf32>
    %cst = arith.constant dense<0.000000e+00> : vector<8x512xf32>
    %5 = vector.multi_reduction <add>, %3, %cst [1] : vector<8x8x512xf32> to vector<8x512xf32>
    %6 = arith.addf %4, %5 : vector<8x512xf32>
    %c0_5 = arith.constant 0 : index
    %c0_6 = arith.constant 0 : index
    %7 = vector.load %arg6[%c0_5, %c0_6] : memref<8x512xf32, #tpu.memory_space<vmem>>, vector<8x512xf32>
    tpu.vector_store %arg6[%c0_5, %c0_6], %6 {strides = array<i32>} : memref<8x512xf32, #tpu.memory_space<vmem>>, vector<8x512xf32>,
    %c0_i32_7 = arith.constant 0 : i32
    %8 = arith.cmpi eq, %arg1, %c0_i32_7 : i32
    %9 = arith.extui %8 : i1 to i32
    %c0_i32_8 = arith.constant 0 : i32
    %10 = arith.cmpi ne, %9, %c0_i32_8 : i32
    scf.if %10 {
      %c0_9 = arith.constant 0 : index
      %c0_10 = arith.constant 0 : index
      %11 = vector.load %arg6[%c0_9, %c0_10] : memref<8x512xf32, #tpu.memory_space<vmem>>, vector<8x512xf32>
      %cst_11 = arith.constant 1.250000e-01 : f32
      %12 = vector.broadcast %cst_11 : f32 to vector<8x512xf32>
      %13 = arith.mulf %11, %12 : vector<8x512xf32>
      %c0_12 = arith.constant 0 : index
      %c0_13 = arith.constant 0 : index
      %14 = vector.load %arg3[%c0_12, %c0_13] : memref<512x768xf32, #tpu.memory_space<vmem>>, vector<512x768xf32>
      %cst_14 = arith.constant dense<0.000000e+00> : vector<8x768xf32>
      %15 = tpu.matmul %13, %14, %cst_14 {dimension_numbers = #tpu.dot_dimension_numbers<[1], [0], [0], [1], [0, 0, 1, 1], [], []>} : vector<8x512xf32>, vector<512x768xf32>, vector<8x768xf32> -> vector<8x768xf32>
      %c0_15 = arith.constant 0 : index
      %c0_16 = arith.constant 0 : index
      %16 = vector.load %arg4[%c0_15, %c0_16] : memref<1x768xf32, #tpu.memory_space<vmem>>, vector<1x768xf32>
      %17 = vector.broadcast %16 : vector<1x768xf32> to vector<8x768xf32>
      %18 = arith.addf %15, %17 : vector<8x768xf32>
      %c0_17 = arith.constant 0 : index
      %c0_18 = arith.constant 0 : index
      %19 = vector.load %arg5[%c0_17, %c0_18] : memref<8x768xf32, #tpu.memory_space<vmem>>, vector<8x768xf32>
      tpu.vector_store %arg5[%c0_17, %c0_18], %18 {strides = array<i32>} : memref<8x768xf32, #tpu.memory_space<vmem>>, vector<8x768xf32>,
    } else {
    }
    return
  }
  func.func @transform_0(%arg0: i32, %arg1: i32) -> (i32, i32, i32) {
    %c0_i32 = arith.constant 0 : i32
    %c0_i32_0 = arith.constant 0 : i32
    return %arg0, %arg1, %c0_i32 : i32, i32, i32
  }
  func.func @transform_1(%arg0: i32, %arg1: i32) -> (i32, i32) {
    %c0_i32 = arith.constant 0 : i32
    %c0_i32_0 = arith.constant 0 : i32
    %c0_i32_1 = arith.constant 0 : i32
    return %c0_i32, %c0_i32_0 : i32, i32
  }
  func.func @transform_2(%arg0: i32, %arg1: i32) -> (i32, i32) {
    %c0_i32 = arith.constant 0 : i32
    %c0_i32_0 = arith.constant 0 : i32
    %c0_i32_1 = arith.constant 0 : i32
    return %c0_i32, %c0_i32_0 : i32, i32
  }
  func.func @transform_3(%arg0: i32, %arg1: i32) -> (i32, i32) {
    %c0_i32 = arith.constant 0 : i32
    %c0_i32_0 = arith.constant 0 : i32
    return %arg0, %c0_i32 : i32, i32
  }
}

module attributes {stable_mosaic.version = 11 : i64} {
  func.func @mean_pool_linear_kernel(%arg0: i32, %arg1: i32, %arg2: memref<8x8x512xf32, #tpu.memory_space<vmem>>, %arg3: memref<512x768xf32, #tpu.memory_space<vmem>>, %arg4: memref<1x768xf32, #tpu.memory_space<vmem>>, %arg5: memref<8x768xf32, #tpu.memory_space<vmem>>, %arg6: memref<8x512xf32, #tpu.memory_space<vmem>>) attributes {dimension_semantics = [#tpu.dimension_semantics<parallel>, #tpu.dimension_semantics<arbitrary>], iteration_bounds = array<i64: 1, 1>, scalar_prefetch = 0 : i64, scratch_operands = 1 : i64, tpu.core_type = #tpu.core_type<tc>, window_params = [{transform_indices = @transform_0, window_bounds = array<i64: 8, 8, 512>}, {pipeline_mode = #tpu.pipeline_mode<synchronous>, transform_indices = @transform_1, window_bounds = array<i64: 512, 768>}, {pipeline_mode = #tpu.pipeline_mode<synchronous>, transform_indices = @transform_2, window_bounds = array<i64: 1, 768>}, {transform_indices = @transform_3, window_bounds = array<i64: 8, 768>}]} {
    %c0_i32 = arith.constant 0 : i32
    %0 = arith.cmpi eq, %arg1, %c0_i32 : i32
    %1 = arith.extui %0 : i1 to i32
    %c0_i32_0 = arith.constant 0 : i32
    %2 = arith.cmpi ne, %1, %c0_i32_0 : i32
    scf.if %2 {
      %cst_9 = arith.constant 0.000000e+00 : f32
      %11 = vector.broadcast %cst_9 : f32 to vector<8x512xf32>
      %c0_10 = arith.constant 0 : index
      %c0_11 = arith.constant 0 : index
      %12 = vector.load %arg6[%c0_10, %c0_11] : memref<8x512xf32, #tpu.memory_space<vmem>>, vector<8x512xf32>
      tpu.vector_store %arg6[%c0_10, %c0_11], %11 {strides = array<i32>} : memref<8x512xf32, #tpu.memory_space<vmem>>, vector<8x512xf32>,
    } else {
    }
    %c0 = arith.constant 0 : index
    %c0_1 = arith.constant 0 : index
    %c0_2 = arith.constant 0 : index
    %3 = vector.load %arg2[%c0, %c0_1, %c0_2] : memref<8x8x512xf32, #tpu.memory_space<vmem>>, vector<8x8x512xf32>
    %c0_3 = arith.constant 0 : index
    %c0_4 = arith.constant 0 : index
    %4 = vector.load %arg6[%c0_3, %c0_4] : memref<8x512xf32, #tpu.memory_space<vmem>>, vector<8x512xf32>
    %cst = arith.constant dense<0.000000e+00> : vector<8x512xf32>
    %5 = vector.multi_reduction <add>, %3, %cst [1] : vector<8x8x512xf32> to vector<8x512xf32>
    %6 = arith.addf %4, %5 : vector<8x512xf32>
    %c0_5 = arith.constant 0 : index
    %c0_6 = arith.constant 0 : index
    %7 = vector.load %arg6[%c0_5, %c0_6] : memref<8x512xf32, #tpu.memory_space<vmem>>, vector<8x512xf32>
    tpu.vector_store %arg6[%c0_5, %c0_6], %6 {strides = array<i32>} : memref<8x512xf32, #tpu.memory_space<vmem>>, vector<8x512xf32>,
    %c0_i32_7 = arith.constant 0 : i32
    %8 = arith.cmpi eq, %arg1, %c0_i32_7 : i32
    %9 = arith.extui %8 : i1 to i32
    %c0_i32_8 = arith.constant 0 : i32
    %10 = arith.cmpi ne, %9, %c0_i32_8 : i32
    scf.if %10 {
      %c0_9 = arith.constant 0 : index
      %c0_10 = arith.constant 0 : index
      %11 = vector.load %arg6[%c0_9, %c0_10] : memref<8x512xf32, #tpu.memory_space<vmem>>, vector<8x512xf32>
      %cst_11 = arith.constant 1.250000e-01 : f32
      %12 = vector.broadcast %cst_11 : f32 to vector<8x512xf32>
      %13 = arith.mulf %11, %12 : vector<8x512xf32>
      %c0_12 = arith.constant 0 : index
      %c0_13 = arith.constant 0 : index
      %14 = vector.load %arg3[%c0_12, %c0_13] : memref<512x768xf32, #tpu.memory_space<vmem>>, vector<512x768xf32>
      %cst_14 = arith.constant dense<0.000000e+00> : vector<8x768xf32>
      %15 = tpu.matmul %13, %14, %cst_14 {dimension_numbers = #tpu.dot_dimension_numbers<[1], [0], [0], [1], [0, 0, 1, 1], [], []>} : vector<8x512xf32>, vector<512x768xf32>, vector<8x768xf32> -> vector<8x768xf32>
      %c0_15 = arith.constant 0 : index
      %c0_16 = arith.constant 0 : index
      %16 = vector.load %arg4[%c0_15, %c0_16] : memref<1x768xf32, #tpu.memory_space<vmem>>, vector<1x768xf32>
      %17 = vector.broadcast %16 : vector<1x768xf32> to vector<8x768xf32>
      %18 = arith.addf %15, %17 : vector<8x768xf32>
      %c0_17 = arith.constant 0 : index
      %c0_18 = arith.constant 0 : index
      %19 = vector.load %arg5[%c0_17, %c0_18] : memref<8x768xf32, #tpu.memory_space<vmem>>, vector<8x768xf32>
      tpu.vector_store %arg5[%c0_17, %c0_18], %18 {strides = array<i32>} : memref<8x768xf32, #tpu.memory_space<vmem>>, vector<8x768xf32>,
    } else {
    }
    return
  }
  func.func @transform_0(%arg0: i32, %arg1: i32) -> (i32, i32, i32) {
    %c0_i32 = arith.constant 0 : i32
    %c0_i32_0 = arith.constant 0 : i32
    return %arg0, %arg1, %c0_i32 : i32, i32, i32
  }
  func.func @transform_1(%arg0: i32, %arg1: i32) -> (i32, i32) {
    %c0_i32 = arith.constant 0 : i32
    %c0_i32_0 = arith.constant 0 : i32
    %c0_i32_1 = arith.constant 0 : i32
    return %c0_i32, %c0_i32_0 : i32, i32
  }
  func.func @transform_2(%arg0: i32, %arg1: i32) -> (i32, i32) {
    %c0_i32 = arith.constant 0 : i32
    %c0_i32_0 = arith.constant 0 : i32
    %c0_i32_1 = arith.constant 0 : i32
    return %c0_i32, %c0_i32_0 : i32, i32
  }
  func.func @transform_3(%arg0: i32, %arg1: i32) -> (i32, i32) {
    %c0_i32 = arith.constant 0 : i32
    %c0_i32_0 = arith.constant 0 : i32
    return %arg0, %c0_i32 : i32, i32
  }
}

</mosaic_0001>

<llo_original>
// kernel: tpu_custom_call.1
$region0: #{tpu_custom_call.1}
  #allocation0 [shape = 'u32[]', space=smem, size = 0x4, offset = 0x4, fixed_abs, tag = 'smem constant byte address 0x4 - core index']
  #allocation1 [shape = 'u32[144,128]{1,0:T(1,128)}', space=vmem, size = 0x12000, scoped, tag = 'internal scratch']
  #allocation2 [shape = 'f32[8,512]{1,0:T(8,128)}', space=vmem, size = 0x4000, scoped, tag = 'scratch operand']
  %s0 = inlined_call_operand.hbm [shape: f32[2,8,512], index: 0, kind: input, shape index: {}]
  %s1 = inlined_call_operand.hbm [shape: f32[512,768], index: 1, kind: input, shape index: {}]
  %s2 = inlined_call_operand.hbm [shape: f32[1,768], index: 2, kind: input, shape index: {}]
  %s3 = inlined_call_operand.hbm [shape: f32[2,768], index: 3, kind: output, shape index: {}]
  %s4 = sld [smem:[#allocation0]]
  $region42: #{tpu_custom_call.1} parent=0
    _
  %s6 = ssub.s32 1, %s4
  %s7 = scalar_select 0, %s6, %s4
  $region1: #{tpu_custom_call.1} parent=0
    #allocation3 [shape = 'u8[131072]{0}', space=vmem, size = 0x20000, scoped, tag = 'input window, operand 0, single buffered']
    #allocation4 [shape = 's32[1]{0}', space=sflag, size = 0x4, scoped, tag = 'scoped memory for tpu_custom_call.1']
    #allocation5 [shape = 's32[1]{0}', space=sflag, size = 0x4, scoped, tag = 'scoped memory for tpu_custom_call.1']
    #allocation6 [shape = 'u8[1572864]{0}', space=vmem, size = 0x180000, scoped, tag = 'input window, operand 1, single buffered']
    #allocation7 [shape = 's32[1]{0}', space=sflag, size = 0x4, scoped, tag = 'scoped memory for tpu_custom_call.1']
    #allocation8 [shape = 'u8[3072]{0}', space=vmem, size = 0xc00, scoped, tag = 'input window, operand 2, single buffered']
    #allocation9 [shape = 'u8[24576]{0}', space=vmem, size = 0x6000, scoped, tag = 'output window, operand 0, single buffered']
    %8 = vsyncpa [#allocation4], 0
    %9 = vsyncpa [#allocation7], 0
    %10 = vsyncpa [#allocation5], 0
    // Predicated region
    $region2: #{tpu_custom_call.1} parent=1 // pred_check
      _
    $region3: #{tpu_custom_call.1} parent=1 // pred_check_branch
      %12 = sbr.rel (0) target = $region5
    $region4: #{tpu_custom_call.1} parent=1 // pred_region
      %s14 = ssub.s32 4096, 1024
      %15 = vsyncadd [#allocation4], %s14
      %s16 = sshll.u32 [#allocation3], 4
      %s17 = int_to_ptr.vmem [resolvable:$true] %s16
      %22 = dma.hbm_to_vmem [thread:$0]  %s0, 1024, %s17, [#allocation4], 512, 512, 32
    $region5: #{tpu_custom_call.1} parent=1 // pred_fallthru
      _
    // Predicated region
    $region6: #{tpu_custom_call.1} parent=1 // pred_check
      _
    $region7: #{tpu_custom_call.1} parent=1 // pred_check_branch
      %24 = sbr.rel (0) target = $region9
    $region8: #{tpu_custom_call.1} parent=1 // pred_region
      %s26 = ssub.s32 49152, 49152
      %27 = vsyncadd [#allocation7], %s26
      %s28 = sshll.u32 [#allocation6], 4
      %s29 = int_to_ptr.vmem [resolvable:$true] %s28
      %34 = dma.hbm_to_vmem [thread:$0]  %s1, 49152, %s29, [#allocation7], 768, 768, 48
    $region9: #{tpu_custom_call.1} parent=1 // pred_fallthru
      _
    // Predicated region
    $region10: #{tpu_custom_call.1} parent=1 // pred_check
      _
    $region11: #{tpu_custom_call.1} parent=1 // pred_check_branch
      %36 = sbr.rel (0) target = $region13
    $region12: #{tpu_custom_call.1} parent=1 // pred_region
      %s38 = ssub.s32 96, 96
      %39 = vsyncadd [#allocation7], %s38
      %s41 = sshll.u32 [#allocation8], 4
      %s42 = int_to_ptr.vmem [resolvable:$true] %s41
      %44 = dma.hbm_to_vmem [thread:$0]  %s2, 96, %s42, [#allocation7]
    $region13: #{tpu_custom_call.1} parent=1 // pred_fallthru
      _
    // Predicated region
    $region14: #{tpu_custom_call.1} parent=1 // pred_check
      _
    $region15: #{tpu_custom_call.1} parent=1 // pred_check_branch
      %46 = sbr.rel (0) target = $region17
    $region16: #{tpu_custom_call.1} parent=1 // pred_region
      %47 = dma.done [#allocation4], 4096
    $region17: #{tpu_custom_call.1} parent=1 // pred_fallthru
      _
    // Predicated region
    $region18: #{tpu_custom_call.1} parent=1 // pred_check
      _
    $region19: #{tpu_custom_call.1} parent=1 // pred_check_branch
      %49 = sbr.rel (0) target = $region21
    $region20: #{tpu_custom_call.1} parent=1 // pred_region
      %50 = dma.done [#allocation7], 49152
    $region21: #{tpu_custom_call.1} parent=1 // pred_fallthru
      _
    // Predicated region
    $region22: #{tpu_custom_call.1} parent=1 // pred_check
      _
    $region23: #{tpu_custom_call.1} parent=1 // pred_check_branch
      %52 = sbr.rel (0) target = $region25
    $region24: #{tpu_custom_call.1} parent=1 // pred_region
      %53 = dma.done [#allocation7], 96
    $region25: #{tpu_custom_call.1} parent=1 // pred_fallthru
      _
    %p54 = scmp.eq.s32.totalorder 0, 0
    // Predicated region
    $region26: #{tpu_custom_call.1} parent=1 // pred_check
      %p55 = pneg %p54
    $region27: #{tpu_custom_call.1} parent=1 // pred_check_branch
      %57 = sbr.rel (%p55) target = $region29
    $region28: #{tpu_custom_call.1} parent=1 // pred_region
      %58 = vst [vmem:[#allocation2] sm:$0xff] 0.0
      %59 = vst [vmem:[#allocation2 + $0x8] sm:$0xff] 0.0
      %60 = vst [vmem:[#allocation2 + $0x10] sm:$0xff] 0.0
      %61 = vst [vmem:[#allocation2 + $0x18] sm:$0xff] 0.0
    $region29: #{tpu_custom_call.1} parent=1 // pred_fallthru
      _
    %v62 = vld [vmem:[#allocation3] sm:$0xff]
    %v63 = vld [vmem:[#allocation3 + $0x8] sm:$0xff]
    %v64 = vld [vmem:[#allocation3 + $0x10] sm:$0xff]
    %v65 = vld [vmem:[#allocation3 + $0x18] sm:$0xff]
    %v66 = vld [vmem:[#allocation3 + $0x20] sm:$0xff]
    %v67 = vld [vmem:[#allocation3 + $0x28] sm:$0xff]
    %v68 = vld [vmem:[#allocation3 + $0x30] sm:$0xff]
    %v69 = vld [vmem:[#allocation3 + $0x38] sm:$0xff]
    %v70 = vld [vmem:[#allocation3 + $0x40] sm:$0xff]
    %v71 = vld [vmem:[#allocation3 + $0x48] sm:$0xff]
    %v72 = vld [vmem:[#allocation3 + $0x50] sm:$0xff]
    %v73 = vld [vmem:[#allocation3 + $0x58] sm:$0xff]
    %v74 = vld [vmem:[#allocation3 + $0x60] sm:$0xff]
    %v75 = vld [vmem:[#allocation3 + $0x68] sm:$0xff]
    %v76 = vld [vmem:[#allocation3 + $0x70] sm:$0xff]
    %v77 = vld [vmem:[#allocation3 + $0x78] sm:$0xff]
    %v78 = vld [vmem:[#allocation3 + $0x80] sm:$0xff]
    %v79 = vld [vmem:[#allocation3 + $0x88] sm:$0xff]
    %v80 = vld [vmem:[#allocation3 + $0x90] sm:$0xff]
    %v81 = vld [vmem:[#allocation3 + $0x98] sm:$0xff]
    %v82 = vld [vmem:[#allocation3 + $0xa0] sm:$0xff]
    %v83 = vld [vmem:[#allocation3 + $0xa8] sm:$0xff]
    %v84 = vld [vmem:[#allocation3 + $0xb0] sm:$0xff]
    %v85 = vld [vmem:[#allocation3 + $0xb8] sm:$0xff]
    %v86 = vld [vmem:[#allocation3 + $0xc0] sm:$0xff]
    %v87 = vld [vmem:[#allocation3 + $0xc8] sm:$0xff]
    %v88 = vld [vmem:[#allocation3 + $0xd0] sm:$0xff]
    %v89 = vld [vmem:[#allocation3 + $0xd8] sm:$0xff]
    %v90 = vld [vmem:[#allocation3 + $0xe0] sm:$0xff]
    %v91 = vld [vmem:[#allocation3 + $0xe8] sm:$0xff]
    %v92 = vld [vmem:[#allocation3 + $0xf0] sm:$0xff]
    %v93 = vld [vmem:[#allocation3 + $0xf8] sm:$0xff]
    %v94 = vld [vmem:[#allocation2] sm:$0xff]
    %v95 = vld [vmem:[#allocation2 + $0x8] sm:$0xff]
    %v96 = vld [vmem:[#allocation2 + $0x10] sm:$0xff]
    %v97 = vld [vmem:[#allocation2 + $0x18] sm:$0xff]
    %v98 = vrot.slane %v62, 4
    %v99 = vadd.f32 %v62, %v98
    %v100 = vrot.slane %v99, 2
    %v101 = vadd.f32 %v99, %v100
    %v102 = vrot.slane %v101, 1
    %v103 = vadd.f32 %v101, %v102
    %v104 = vrot.slane %v63, 4
    %v105 = vadd.f32 %v63, %v104
    %v106 = vrot.slane %v105, 2
    %v107 = vadd.f32 %v105, %v106
    %v108 = vrot.slane %v107, 1
    %v109 = vadd.f32 %v107, %v108
    %v110 = vrot.slane %v64, 4
    %v111 = vadd.f32 %v64, %v110
    %v112 = vrot.slane %v111, 2
    %v113 = vadd.f32 %v111, %v112
    %v114 = vrot.slane %v113, 1
    %v115 = vadd.f32 %v113, %v114
    %v116 = vrot.slane %v65, 4
    %v117 = vadd.f32 %v65, %v116
    %v118 = vrot.slane %v117, 2
    %v119 = vadd.f32 %v117, %v118
    %v120 = vrot.slane %v119, 1
    %v121 = vadd.f32 %v119, %v120
    %v122 = vrot.slane %v66, 4
    %v123 = vadd.f32 %v66, %v122
    %v124 = vrot.slane %v123, 2
    %v125 = vadd.f32 %v123, %v124
    %v126 = vrot.slane %v125, 1
    %v127 = vadd.f32 %v125, %v126
    %v128 = vrot.slane %v67, 4
    %v129 = vadd.f32 %v67, %v128
    %v130 = vrot.slane %v129, 2
    %v131 = vadd.f32 %v129, %v130
    %v132 = vrot.slane %v131, 1
    %v133 = vadd.f32 %v131, %v132
    %v134 = vrot.slane %v68, 4
    %v135 = vadd.f32 %v68, %v134
    %v136 = vrot.slane %v135, 2
    %v137 = vadd.f32 %v135, %v136
    %v138 = vrot.slane %v137, 1
    %v139 = vadd.f32 %v137, %v138
    %v140 = vrot.slane %v69, 4
    %v141 = vadd.f32 %v69, %v140
    %v142 = vrot.slane %v141, 2
    %v143 = vadd.f32 %v141, %v142
    %v144 = vrot.slane %v143, 1
    %v145 = vadd.f32 %v143, %v144
    %v146 = vrot.slane %v70, 4
    %v147 = vadd.f32 %v70, %v146
    %v148 = vrot.slane %v147, 2
    %v149 = vadd.f32 %v147, %v148
    %v150 = vrot.slane %v149, 1
    %v151 = vadd.f32 %v149, %v150
    %v152 = vrot.slane %v71, 4
    %v153 = vadd.f32 %v71, %v152
    %v154 = vrot.slane %v153, 2
    %v155 = vadd.f32 %v153, %v154
    %v156 = vrot.slane %v155, 1
    %v157 = vadd.f32 %v155, %v156
    %v158 = vrot.slane %v72, 4
    %v159 = vadd.f32 %v72, %v158
    %v160 = vrot.slane %v159, 2
    %v161 = vadd.f32 %v159, %v160
    %v162 = vrot.slane %v161, 1
    %v163 = vadd.f32 %v161, %v162
    %v164 = vrot.slane %v73, 4
    %v165 = vadd.f32 %v73, %v164
    %v166 = vrot.slane %v165, 2
    %v167 = vadd.f32 %v165, %v166
    %v168 = vrot.slane %v167, 1
    %v169 = vadd.f32 %v167, %v168
    %v170 = vrot.slane %v74, 4
    %v171 = vadd.f32 %v74, %v170
    %v172 = vrot.slane %v171, 2
    %v173 = vadd.f32 %v171, %v172
    %v174 = vrot.slane %v173, 1
    %v175 = vadd.f32 %v173, %v174
    %v176 = vrot.slane %v75, 4
    %v177 = vadd.f32 %v75, %v176
    %v178 = vrot.slane %v177, 2
    %v179 = vadd.f32 %v177, %v178
    %v180 = vrot.slane %v179, 1
    %v181 = vadd.f32 %v179, %v180
    %v182 = vrot.slane %v76, 4
    %v183 = vadd.f32 %v76, %v182
    %v184 = vrot.slane %v183, 2
    %v185 = vadd.f32 %v183, %v184
    %v186 = vrot.slane %v185, 1
    %v187 = vadd.f32 %v185, %v186
    %v188 = vrot.slane %v77, 4
    %v189 = vadd.f32 %v77, %v188
    %v190 = vrot.slane %v189, 2
    %v191 = vadd.f32 %v189, %v190
    %v192 = vrot.slane %v191, 1
    %v193 = vadd.f32 %v191, %v192
    %v194 = vrot.slane %v78, 4
    %v195 = vadd.f32 %v78, %v194
    %v196 = vrot.slane %v195, 2
    %v197 = vadd.f32 %v195, %v196
    %v198 = vrot.slane %v197, 1
    %v199 = vadd.f32 %v197, %v198
    %v200 = vrot.slane %v79, 4
    %v201 = vadd.f32 %v79, %v200
    %v202 = vrot.slane %v201, 2
    %v203 = vadd.f32 %v201, %v202
    %v204 = vrot.slane %v203, 1
    %v205 = vadd.f32 %v203, %v204
    %v206 = vrot.slane %v80, 4
    %v207 = vadd.f32 %v80, %v206
    %v208 = vrot.slane %v207, 2
    %v209 = vadd.f32 %v207, %v208
    %v210 = vrot.slane %v209, 1
    %v211 = vadd.f32 %v209, %v210
    %v212 = vrot.slane %v81, 4
    %v213 = vadd.f32 %v81, %v212
    %v214 = vrot.slane %v213, 2
    %v215 = vadd.f32 %v213, %v214
    %v216 = vrot.slane %v215, 1
    %v217 = vadd.f32 %v215, %v216
    %v218 = vrot.slane %v82, 4
    %v219 = vadd.f32 %v82, %v218
    %v220 = vrot.slane %v219, 2
    %v221 = vadd.f32 %v219, %v220
    %v222 = vrot.slane %v221, 1
    %v223 = vadd.f32 %v221, %v222
    %v224 = vrot.slane %v83, 4
    %v225 = vadd.f32 %v83, %v224
    %v226 = vrot.slane %v225, 2
    %v227 = vadd.f32 %v225, %v226
    %v228 = vrot.slane %v227, 1
    %v229 = vadd.f32 %v227, %v228
    %v230 = vrot.slane %v84, 4
    %v231 = vadd.f32 %v84, %v230
    %v232 = vrot.slane %v231, 2
    %v233 = vadd.f32 %v231, %v232
    %v234 = vrot.slane %v233, 1
    %v235 = vadd.f32 %v233, %v234
    %v236 = vrot.slane %v85, 4
    %v237 = vadd.f32 %v85, %v236
    %v238 = vrot.slane %v237, 2
    %v239 = vadd.f32 %v237, %v238
    %v240 = vrot.slane %v239, 1
    %v241 = vadd.f32 %v239, %v240
    %v242 = vrot.slane %v86, 4
    %v243 = vadd.f32 %v86, %v242
    %v244 = vrot.slane %v243, 2
    %v245 = vadd.f32 %v243, %v244
    %v246 = vrot.slane %v245, 1
    %v247 = vadd.f32 %v245, %v246
    %v248 = vrot.slane %v87, 4
    %v249 = vadd.f32 %v87, %v248
    %v250 = vrot.slane %v249, 2
    %v251 = vadd.f32 %v249, %v250
    %v252 = vrot.slane %v251, 1
    %v253 = vadd.f32 %v251, %v252
    %v254 = vrot.slane %v88, 4
    %v255 = vadd.f32 %v88, %v254
    %v256 = vrot.slane %v255, 2
    %v257 = vadd.f32 %v255, %v256
    %v258 = vrot.slane %v257, 1
    %v259 = vadd.f32 %v257, %v258
    %v260 = vrot.slane %v89, 4
    %v261 = vadd.f32 %v89, %v260
    %v262 = vrot.slane %v261, 2
    %v263 = vadd.f32 %v261, %v262
    %v264 = vrot.slane %v263, 1
    %v265 = vadd.f32 %v263, %v264
    %v266 = vrot.slane %v90, 4
    %v267 = vadd.f32 %v90, %v266
    %v268 = vrot.slane %v267, 2
    %v269 = vadd.f32 %v267, %v268
    %v270 = vrot.slane %v269, 1
    %v271 = vadd.f32 %v269, %v270
    %v272 = vrot.slane %v91, 4
    %v273 = vadd.f32 %v91, %v272
    %v274 = vrot.slane %v273, 2
    %v275 = vadd.f32 %v273, %v274
    %v276 = vrot.slane %v275, 1
    %v277 = vadd.f32 %v275, %v276
    %v278 = vrot.slane %v92, 4
    %v279 = vadd.f32 %v92, %v278
    %v280 = vrot.slane %v279, 2
    %v281 = vadd.f32 %v279, %v280
    %v282 = vrot.slane %v281, 1
    %v283 = vadd.f32 %v281, %v282
    %v284 = vrot.slane %v93, 4
    %v285 = vadd.f32 %v93, %v284
    %v286 = vrot.slane %v285, 2
    %v287 = vadd.f32 %v285, %v286
    %v288 = vrot.slane %v287, 1
    %v289 = vadd.f32 %v287, %v288
    %vm322 = vcmask 1041409
    %v323 = vsel %vm322, %v127, %v103
    %vm324 = vcmask 1042434
    %v325 = vsel %vm324, %v151, %v323
    %vm326 = vcmask 1043459
    %v327 = vsel %vm326, %v175, %v325
    %vm328 = vcmask 1044484
    %v329 = vsel %vm328, %v199, %v327
    %vm330 = vcmask 1045509
    %v331 = vsel %vm330, %v223, %v329
    %vm332 = vcmask 1046534
    %v333 = vsel %vm332, %v247, %v331
    %vm334 = vcmask 1047559
    %v335 = vsel %vm334, %v271, %v333
    %v336 = vsel %vm322, %v133, %v109
    %v337 = vsel %vm324, %v157, %v336
    %v338 = vsel %vm326, %v181, %v337
    %v339 = vsel %vm328, %v205, %v338
    %v340 = vsel %vm330, %v229, %v339
    %v341 = vsel %vm332, %v253, %v340
    %v342 = vsel %vm334, %v277, %v341
    %v343 = vsel %vm322, %v139, %v115
    %v344 = vsel %vm324, %v163, %v343
    %v345 = vsel %vm326, %v187, %v344
    %v346 = vsel %vm328, %v211, %v345
    %v347 = vsel %vm330, %v235, %v346
    %v348 = vsel %vm332, %v259, %v347
    %v349 = vsel %vm334, %v283, %v348
    %v350 = vsel %vm322, %v145, %v121
    %v351 = vsel %vm324, %v169, %v350
    %v352 = vsel %vm326, %v193, %v351
    %v353 = vsel %vm328, %v217, %v352
    %v354 = vsel %vm330, %v241, %v353
    %v355 = vsel %vm332, %v265, %v354
    %v356 = vsel %vm334, %v289, %v355
    %v361 = vadd.f32 %v94, %v335
    %v362 = vadd.f32 %v95, %v342
    %v363 = vadd.f32 %v96, %v349
    %v364 = vadd.f32 %v97, %v356
    %365 = vst [vmem:[#allocation2] sm:$0xff] %v361
    %366 = vst [vmem:[#allocation2 + $0x8] sm:$0xff] %v362
    %367 = vst [vmem:[#allocation2 + $0x10] sm:$0xff] %v363
    %368 = vst [vmem:[#allocation2 + $0x18] sm:$0xff] %v364
    // Predicated region
    $region30: #{tpu_custom_call.1} parent=1 // pred_check
      %p369 = pneg %p54
    $region31: #{tpu_custom_call.1} parent=1 // pred_check_branch
      %371 = sbr.rel (%p369) target = $region33
    $region32: #{tpu_custom_call.1} parent=1 // pred_region
      %v372 = vld [vmem:[#allocation2] sm:$0xff]
      %v373 = vld [vmem:[#allocation2 + $0x8] sm:$0xff]
      %v374 = vld [vmem:[#allocation2 + $0x10] sm:$0xff]
      %v375 = vld [vmem:[#allocation2 + $0x18] sm:$0xff]
      %v376 = vmul.f32 %v372, 0.125
      %v377 = vmul.f32 %v373, 0.125
      %v378 = vmul.f32 %v374, 0.125
      %v379 = vmul.f32 %v375, 0.125
      %v380 = vld [vmem:[#allocation6] sm:$0xff]
      %v381 = vld [vmem:[#allocation6 + $0x8] sm:$0xff]
      %v382 = vld [vmem:[#allocation6 + $0x10] sm:$0xff]
      %v383 = vld [vmem:[#allocation6 + $0x18] sm:$0xff]
      %v384 = vld [vmem:[#allocation6 + $0x20] sm:$0xff]
      %v385 = vld [vmem:[#allocation6 + $0x28] sm:$0xff]
      %v386 = vld [vmem:[#allocation6 + $0x30] sm:$0xff]
      %v387 = vld [vmem:[#allocation6 + $0x38] sm:$0xff]
      %v388 = vld [vmem:[#allocation6 + $0x40] sm:$0xff]
      %v389 = vld [vmem:[#allocation6 + $0x48] sm:$0xff]
      %v390 = vld [vmem:[#allocation6 + $0x50] sm:$0xff]
      %v391 = vld [vmem:[#allocation6 + $0x58] sm:$0xff]
      %v392 = vld [vmem:[#allocation6 + $0x60] sm:$0xff]
      %v393 = vld [vmem:[#allocation6 + $0x68] sm:$0xff]
      %v394 = vld [vmem:[#allocation6 + $0x70] sm:$0xff]
      %v395 = vld [vmem:[#allocation6 + $0x78] sm:$0xff]
      %v396 = vld [vmem:[#allocation6 + $0x80] sm:$0xff]
      %v397 = vld [vmem:[#allocation6 + $0x88] sm:$0xff]
      %v398 = vld [vmem:[#allocation6 + $0x90] sm:$0xff]
      %v399 = vld [vmem:[#allocation6 + $0x98] sm:$0xff]
      %v400 = vld [vmem:[#allocation6 + $0xa0] sm:$0xff]
      %v401 = vld [vmem:[#allocation6 + $0xa8] sm:$0xff]
      %v402 = vld [vmem:[#allocation6 + $0xb0] sm:$0xff]
      %v403 = vld [vmem:[#allocation6 + $0xb8] sm:$0xff]
      %v404 = vld [vmem:[#allocation6 + $0xc0] sm:$0xff]
      %v405 = vld [vmem:[#allocation6 + $0xc8] sm:$0xff]
      %v406 = vld [vmem:[#allocation6 + $0xd0] sm:$0xff]
      %v407 = vld [vmem:[#allocation6 + $0xd8] sm:$0xff]
      %v408 = vld [vmem:[#allocation6 + $0xe0] sm:$0xff]
      %v409 = vld [vmem:[#allocation6 + $0xe8] sm:$0xff]
      %v410 = vld [vmem:[#allocation6 + $0xf0] sm:$0xff]
      %v411 = vld [vmem:[#allocation6 + $0xf8] sm:$0xff]
      %v412 = vld [vmem:[#allocation6 + $0x100] sm:$0xff]
      %v413 = vld [vmem:[#allocation6 + $0x108] sm:$0xff]
      %v414 = vld [vmem:[#allocation6 + $0x110] sm:$0xff]
      %v415 = vld [vmem:[#allocation6 + $0x118] sm:$0xff]
      %v416 = vld [vmem:[#allocation6 + $0x120] sm:$0xff]
      %v417 = vld [vmem:[#allocation6 + $0x128] sm:$0xff]
      %v418 = vld [vmem:[#allocation6 + $0x130] sm:$0xff]
      %v419 = vld [vmem:[#allocation6 + $0x138] sm:$0xff]
      %v420 = vld [vmem:[#allocation6 + $0x140] sm:$0xff]
      %v421 = vld [vmem:[#allocation6 + $0x148] sm:$0xff]
      %v422 = vld [vmem:[#allocation6 + $0x150] sm:$0xff]
      %v423 = vld [vmem:[#allocation6 + $0x158] sm:$0xff]
      %v424 = vld [vmem:[#allocation6 + $0x160] sm:$0xff]
      %v425 = vld [vmem:[#allocation6 + $0x168] sm:$0xff]
      %v426 = vld [vmem:[#allocation6 + $0x170] sm:$0xff]
      %v427 = vld [vmem:[#allocation6 + $0x178] sm:$0xff]
      %v428 = vld [vmem:[#allocation6 + $0x180] sm:$0xff]
      %v429 = vld [vmem:[#allocation6 + $0x188] sm:$0xff]
      %v430 = vld [vmem:[#allocation6 + $0x190] sm:$0xff]
      %v431 = vld [vmem:[#allocation6 + $0x198] sm:$0xff]
      %v432 = vld [vmem:[#allocation6 + $0x1a0] sm:$0xff]
      %v433 = vld [vmem:[#allocation6 + $0x1a8] sm:$0xff]
      %v434 = vld [vmem:[#allocation6 + $0x1b0] sm:$0xff]
      %v435 = vld [vmem:[#allocation6 + $0x1b8] sm:$0xff]
      %v436 = vld [vmem:[#allocation6 + $0x1c0] sm:$0xff]
      %v437 = vld [vmem:[#allocation6 + $0x1c8] sm:$0xff]
      %v438 = vld [vmem:[#allocation6 + $0x1d0] sm:$0xff]
      %v439 = vld [vmem:[#allocation6 + $0x1d8] sm:$0xff]
      %v440 = vld [vmem:[#allocation6 + $0x1e0] sm:$0xff]
      %v441 = vld [vmem:[#allocation6 + $0x1e8] sm:$0xff]
      %v442 = vld [vmem:[#allocation6 + $0x1f0] sm:$0xff]
      %v443 = vld [vmem:[#allocation6 + $0x1f8] sm:$0xff]
      %v444 = vld [vmem:[#allocation6 + $0x200] sm:$0xff]
      %v445 = vld [vmem:[#allocation6 + $0x208] sm:$0xff]
      %v446 = vld [vmem:[#allocation6 + $0x210] sm:$0xff]
      %v447 = vld [vmem:[#allocation6 + $0x218] sm:$0xff]
      %v448 = vld [vmem:[#allocation6 + $0x220] sm:$0xff]
      %v449 = vld [vmem:[#allocation6 + $0x228] sm:$0xff]
      %v450 = vld [vmem:[#allocation6 + $0x230] sm:$0xff]
      %v451 = vld [vmem:[#allocation6 + $0x238] sm:$0xff]
      %v452 = vld [vmem:[#allocation6 + $0x240] sm:$0xff]
      %v453 = vld [vmem:[#allocation6 + $0x248] sm:$0xff]
      %v454 = vld [vmem:[#allocation6 + $0x250] sm:$0xff]
      %v455 = vld [vmem:[#allocation6 + $0x258] sm:$0xff]
      %v456 = vld [vmem:[#allocation6 + $0x260] sm:$0xff]
      %v457 = vld [vmem:[#allocation6 + $0x268] sm:$0xff]
      %v458 = vld [vmem:[#allocation6 + $0x270] sm:$0xff]
      %v459 = vld [vmem:[#allocation6 + $0x278] sm:$0xff]
      %v460 = vld [vmem:[#allocation6 + $0x280] sm:$0xff]
      %v461 = vld [vmem:[#allocation6 + $0x288] sm:$0xff]
      %v462 = vld [vmem:[#allocation6 + $0x290] sm:$0xff]
      %v463 = vld [vmem:[#allocation6 + $0x298] sm:$0xff]
      %v464 = vld [vmem:[#allocation6 + $0x2a0] sm:$0xff]
      %v465 = vld [vmem:[#allocation6 + $0x2a8] sm:$0xff]
      %v466 = vld [vmem:[#allocation6 + $0x2b0] sm:$0xff]
      %v467 = vld [vmem:[#allocation6 + $0x2b8] sm:$0xff]
      %v468 = vld [vmem:[#allocation6 + $0x2c0] sm:$0xff]
      %v469 = vld [vmem:[#allocation6 + $0x2c8] sm:$0xff]
      %v470 = vld [vmem:[#allocation6 + $0x2d0] sm:$0xff]
      %v471 = vld [vmem:[#allocation6 + $0x2d8] sm:$0xff]
      %v472 = vld [vmem:[#allocation6 + $0x2e0] sm:$0xff]
      %v473 = vld [vmem:[#allocation6 + $0x2e8] sm:$0xff]
      %v474 = vld [vmem:[#allocation6 + $0x2f0] sm:$0xff]
      %v475 = vld [vmem:[#allocation6 + $0x2f8] sm:$0xff]
      %v476 = vld [vmem:[#allocation6 + $0x300] sm:$0xff]
      %v477 = vld [vmem:[#allocation6 + $0x308] sm:$0xff]
      %v478 = vld [vmem:[#allocation6 + $0x310] sm:$0xff]
      %v479 = vld [vmem:[#allocation6 + $0x318] sm:$0xff]
      %v480 = vld [vmem:[#allocation6 + $0x320] sm:$0xff]
      %v481 = vld [vmem:[#allocation6 + $0x328] sm:$0xff]
      %v482 = vld [vmem:[#allocation6 + $0x330] sm:$0xff]
      %v483 = vld [vmem:[#allocation6 + $0x338] sm:$0xff]
      %v484 = vld [vmem:[#allocation6 + $0x340] sm:$0xff]
      %v485 = vld [vmem:[#allocation6 + $0x348] sm:$0xff]
      %v486 = vld [vmem:[#allocation6 + $0x350] sm:$0xff]
      %v487 = vld [vmem:[#allocation6 + $0x358] sm:$0xff]
      %v488 = vld [vmem:[#allocation6 + $0x360] sm:$0xff]
      %v489 = vld [vmem:[#allocation6 + $0x368] sm:$0xff]
      %v490 = vld [vmem:[#allocation6 + $0x370] sm:$0xff]
      %v491 = vld [vmem:[#allocation6 + $0x378] sm:$0xff]
      %v492 = vld [vmem:[#allocation6 + $0x380] sm:$0xff]
      %v493 = vld [vmem:[#allocation6 + $0x388] sm:$0xff]
      %v494 = vld [vmem:[#allocation6 + $0x390] sm:$0xff]
      %v495 = vld [vmem:[#allocation6 + $0x398] sm:$0xff]
      %v496 = vld [vmem:[#allocation6 + $0x3a0] sm:$0xff]
      %v497 = vld [vmem:[#allocation6 + $0x3a8] sm:$0xff]
      %v498 = vld [vmem:[#allocation6 + $0x3b0] sm:$0xff]
      %v499 = vld [vmem:[#allocation6 + $0x3b8] sm:$0xff]
      %v500 = vld [vmem:[#allocation6 + $0x3c0] sm:$0xff]
      %v501 = vld [vmem:[#allocation6 + $0x3c8] sm:$0xff]
      %v502 = vld [vmem:[#allocation6 + $0x3d0] sm:$0xff]
      %v503 = vld [vmem:[#allocation6 + $0x3d8] sm:$0xff]
      %v504 = vld [vmem:[#allocation6 + $0x3e0] sm:$0xff]
      %v505 = vld [vmem:[#allocation6 + $0x3e8] sm:$0xff]
      %v506 = vld [vmem:[#allocation6 + $0x3f0] sm:$0xff]
      %v507 = vld [vmem:[#allocation6 + $0x3f8] sm:$0xff]
      %v508 = vld [vmem:[#allocation6 + $0x400] sm:$0xff]
      %v509 = vld [vmem:[#allocation6 + $0x408] sm:$0xff]
      %v510 = vld [vmem:[#allocation6 + $0x410] sm:$0xff]
      %v511 = vld [vmem:[#allocation6 + $0x418] sm:$0xff]
      %v512 = vld [vmem:[#allocation6 + $0x420] sm:$0xff]
      %v513 = vld [vmem:[#allocation6 + $0x428] sm:$0xff]
      %v514 = vld [vmem:[#allocation6 + $0x430] sm:$0xff]
      %v515 = vld [vmem:[#allocation6 + $0x438] sm:$0xff]
      %v516 = vld [vmem:[#allocation6 + $0x440] sm:$0xff]
      %v517 = vld [vmem:[#allocation6 + $0x448] sm:$0xff]
      %v518 = vld [vmem:[#allocation6 + $0x450] sm:$0xff]
      %v519 = vld [vmem:[#allocation6 + $0x458] sm:$0xff]
      %v520 = vld [vmem:[#allocation6 + $0x460] sm:$0xff]
      %v521 = vld [vmem:[#allocation6 + $0x468] sm:$0xff]
      %v522 = vld [vmem:[#allocation6 + $0x470] sm:$0xff]
      %v523 = vld [vmem:[#allocation6 + $0x478] sm:$0xff]
      %v524 = vld [vmem:[#allocation6 + $0x480] sm:$0xff]
      %v525 = vld [vmem:[#allocation6 + $0x488] sm:$0xff]
      %v526 = vld [vmem:[#allocation6 + $0x490] sm:$0xff]
      %v527 = vld [vmem:[#allocation6 + $0x498] sm:$0xff]
      %v528 = vld [vmem:[#allocation6 + $0x4a0] sm:$0xff]
      %v529 = vld [vmem:[#allocation6 + $0x4a8] sm:$0xff]
      %v530 = vld [vmem:[#allocation6 + $0x4b0] sm:$0xff]
      %v531 = vld [vmem:[#allocation6 + $0x4b8] sm:$0xff]
      %v532 = vld [vmem:[#allocation6 + $0x4c0] sm:$0xff]
      %v533 = vld [vmem:[#allocation6 + $0x4c8] sm:$0xff]
      %v534 = vld [vmem:[#allocation6 + $0x4d0] sm:$0xff]
      %v535 = vld [vmem:[#allocation6 + $0x4d8] sm:$0xff]
      %v536 = vld [vmem:[#allocation6 + $0x4e0] sm:$0xff]
      %v537 = vld [vmem:[#allocation6 + $0x4e8] sm:$0xff]
      %v538 = vld [vmem:[#allocation6 + $0x4f0] sm:$0xff]
      %v539 = vld [vmem:[#allocation6 + $0x4f8] sm:$0xff]
      %v540 = vld [vmem:[#allocation6 + $0x500] sm:$0xff]
      %v541 = vld [vmem:[#allocation6 + $0x508] sm:$0xff]
      %v542 = vld [vmem:[#allocation6 + $0x510] sm:$0xff]
      %v543 = vld [vmem:[#allocation6 + $0x518] sm:$0xff]
      %v544 = vld [vmem:[#allocation6 + $0x520] sm:$0xff]
      %v545 = vld [vmem:[#allocation6 + $0x528] sm:$0xff]
      %v546 = vld [vmem:[#allocation6 + $0x530] sm:$0xff]
      %v547 = vld [vmem:[#allocation6 + $0x538] sm:$0xff]
      %v548 = vld [vmem:[#allocation6 + $0x540] sm:$0xff]
      %v549 = vld [vmem:[#allocation6 + $0x548] sm:$0xff]
      %v550 = vld [vmem:[#allocation6 + $0x550] sm:$0xff]
      %v551 = vld [vmem:[#allocation6 + $0x558] sm:$0xff]
      %v552 = vld [vmem:[#allocation6 + $0x560] sm:$0xff]
      %v553 = vld [vmem:[#allocation6 + $0x568] sm:$0xff]
      %v554 = vld [vmem:[#allocation6 + $0x570] sm:$0xff]
      %v555 = vld [vmem:[#allocation6 + $0x578] sm:$0xff]
      %v556 = vld [vmem:[#allocation6 + $0x580] sm:$0xff]
      %v557 = vld [vmem:[#allocation6 + $0x588] sm:$0xff]
      %v558 = vld [vmem:[#allocation6 + $0x590] sm:$0xff]
      %v559 = vld [vmem:[#allocation6 + $0x598] sm:$0xff]
      %v560 = vld [vmem:[#allocation6 + $0x5a0] sm:$0xff]
      %v561 = vld [vmem:[#allocation6 + $0x5a8] sm:$0xff]
      %v562 = vld [vmem:[#allocation6 + $0x5b0] sm:$0xff]
      %v563 = vld [vmem:[#allocation6 + $0x5b8] sm:$0xff]
      %v564 = vld [vmem:[#allocation6 + $0x5c0] sm:$0xff]
      %v565 = vld [vmem:[#allocation6 + $0x5c8] sm:$0xff]
      %v566 = vld [vmem:[#allocation6 + $0x5d0] sm:$0xff]
      %v567 = vld [vmem:[#allocation6 + $0x5d8] sm:$0xff]
      %v568 = vld [vmem:[#allocation6 + $0x5e0] sm:$0xff]
      %v569 = vld [vmem:[#allocation6 + $0x5e8] sm:$0xff]
      %v570 = vld [vmem:[#allocation6 + $0x5f0] sm:$0xff]
      %v571 = vld [vmem:[#allocation6 + $0x5f8] sm:$0xff]
      %v572 = vld [vmem:[#allocation6 + $0x600] sm:$0xff]
      %v573 = vld [vmem:[#allocation6 + $0x608] sm:$0xff]
      %v574 = vld [vmem:[#allocation6 + $0x610] sm:$0xff]
      %v575 = vld [vmem:[#allocation6 + $0x618] sm:$0xff]
      %v576 = vld [vmem:[#allocation6 + $0x620] sm:$0xff]
      %v577 = vld [vmem:[#allocation6 + $0x628] sm:$0xff]
      %v578 = vld [vmem:[#allocation6 + $0x630] sm:$0xff]
      %v579 = vld [vmem:[#allocation6 + $0x638] sm:$0xff]
      %v580 = vld [vmem:[#allocation6 + $0x640] sm:$0xff]
      %v581 = vld [vmem:[#allocation6 + $0x648] sm:$0xff]
      %v582 = vld [vmem:[#allocation6 + $0x650] sm:$0xff]
      %v583 = vld [vmem:[#allocation6 + $0x658] sm:$0xff]
      %v584 = vld [vmem:[#allocation6 + $0x660] sm:$0xff]
      %v585 = vld [vmem:[#allocation6 + $0x668] sm:$0xff]
      %v586 = vld [vmem:[#allocation6 + $0x670] sm:$0xff]
      %v587 = vld [vmem:[#allocation6 + $0x678] sm:$0xff]
      %v588 = vld [vmem:[#allocation6 + $0x680] sm:$0xff]
      %v589 = vld [vmem:[#allocation6 + $0x688] sm:$0xff]
      %v590 = vld [vmem:[#allocation6 + $0x690] sm:$0xff]
      %v591 = vld [vmem:[#allocation6 + $0x698] sm:$0xff]
      %v592 = vld [vmem:[#allocation6 + $0x6a0] sm:$0xff]
      %v593 = vld [vmem:[#allocation6 + $0x6a8] sm:$0xff]
      %v594 = vld [vmem:[#allocation6 + $0x6b0] sm:$0xff]
      %v595 = vld [vmem:[#allocation6 + $0x6b8] sm:$0xff]
      %v596 = vld [vmem:[#allocation6 + $0x6c0] sm:$0xff]
      %v597 = vld [vmem:[#allocation6 + $0x6c8] sm:$0xff]
      %v598 = vld [vmem:[#allocation6 + $0x6d0] sm:$0xff]
      %v599 = vld [vmem:[#allocation6 + $0x6d8] sm:$0xff]
      %v600 = vld [vmem:[#allocation6 + $0x6e0] sm:$0xff]
      %v601 = vld [vmem:[#allocation6 + $0x6e8] sm:$0xff]
      %v602 = vld [vmem:[#allocation6 + $0x6f0] sm:$0xff]
      %v603 = vld [vmem:[#allocation6 + $0x6f8] sm:$0xff]
      %v604 = vld [vmem:[#allocation6 + $0x700] sm:$0xff]
      %v605 = vld [vmem:[#allocation6 + $0x708] sm:$0xff]
      %v606 = vld [vmem:[#allocation6 + $0x710] sm:$0xff]
      %v607 = vld [vmem:[#allocation6 + $0x718] sm:$0xff]
      %v608 = vld [vmem:[#allocation6 + $0x720] sm:$0xff]
      %v609 = vld [vmem:[#allocation6 + $0x728] sm:$0xff]
      %v610 = vld [vmem:[#allocation6 + $0x730] sm:$0xff]
      %v611 = vld [vmem:[#allocation6 + $0x738] sm:$0xff]
      %v612 = vld [vmem:[#allocation6 + $0x740] sm:$0xff]
      %v613 = vld [vmem:[#allocation6 + $0x748] sm:$0xff]
      %v614 = vld [vmem:[#allocation6 + $0x750] sm:$0xff]
      %v615 = vld [vmem:[#allocation6 + $0x758] sm:$0xff]
      %v616 = vld [vmem:[#allocation6 + $0x760] sm:$0xff]
      %v617 = vld [vmem:[#allocation6 + $0x768] sm:$0xff]
      %v618 = vld [vmem:[#allocation6 + $0x770] sm:$0xff]
      %v619 = vld [vmem:[#allocation6 + $0x778] sm:$0xff]
      %v620 = vld [vmem:[#allocation6 + $0x780] sm:$0xff]
      %v621 = vld [vmem:[#allocation6 + $0x788] sm:$0xff]
      %v622 = vld [vmem:[#allocation6 + $0x790] sm:$0xff]
      %v623 = vld [vmem:[#allocation6 + $0x798] sm:$0xff]
      %v624 = vld [vmem:[#allocation6 + $0x7a0] sm:$0xff]
      %v625 = vld [vmem:[#allocation6 + $0x7a8] sm:$0xff]
      %v626 = vld [vmem:[#allocation6 + $0x7b0] sm:$0xff]
      %v627 = vld [vmem:[#allocation6 + $0x7b8] sm:$0xff]
      %v628 = vld [vmem:[#allocation6 + $0x7c0] sm:$0xff]
      %v629 = vld [vmem:[#allocation6 + $0x7c8] sm:$0xff]
      %v630 = vld [vmem:[#allocation6 + $0x7d0] sm:$0xff]
      %v631 = vld [vmem:[#allocation6 + $0x7d8] sm:$0xff]
      %v632 = vld [vmem:[#allocation6 + $0x7e0] sm:$0xff]
      %v633 = vld [vmem:[#allocation6 + $0x7e8] sm:$0xff]
      %v634 = vld [vmem:[#allocation6 + $0x7f0] sm:$0xff]
      %v635 = vld [vmem:[#allocation6 + $0x7f8] sm:$0xff]
      %v636 = vld [vmem:[#allocation6 + $0x800] sm:$0xff]
      %v637 = vld [vmem:[#allocation6 + $0x808] sm:$0xff]
      %v638 = vld [vmem:[#allocation6 + $0x810] sm:$0xff]
      %v639 = vld [vmem:[#allocation6 + $0x818] sm:$0xff]
      %v640 = vld [vmem:[#allocation6 + $0x820] sm:$0xff]
      %v641 = vld [vmem:[#allocation6 + $0x828] sm:$0xff]
      %v642 = vld [vmem:[#allocation6 + $0x830] sm:$0xff]
      %v643 = vld [vmem:[#allocation6 + $0x838] sm:$0xff]
      %v644 = vld [vmem:[#allocation6 + $0x840] sm:$0xff]
      %v645 = vld [vmem:[#allocation6 + $0x848] sm:$0xff]
      %v646 = vld [vmem:[#allocation6 + $0x850] sm:$0xff]
      %v647 = vld [vmem:[#allocation6 + $0x858] sm:$0xff]
      %v648 = vld [vmem:[#allocation6 + $0x860] sm:$0xff]
      %v649 = vld [vmem:[#allocation6 + $0x868] sm:$0xff]
      %v650 = vld [vmem:[#allocation6 + $0x870] sm:$0xff]
      %v651 = vld [vmem:[#allocation6 + $0x878] sm:$0xff]
      %v652 = vld [vmem:[#allocation6 + $0x880] sm:$0xff]
      %v653 = vld [vmem:[#allocation6 + $0x888] sm:$0xff]
      %v654 = vld [vmem:[#allocation6 + $0x890] sm:$0xff]
      %v655 = vld [vmem:[#allocation6 + $0x898] sm:$0xff]
      %v656 = vld [vmem:[#allocation6 + $0x8a0] sm:$0xff]
      %v657 = vld [vmem:[#allocation6 + $0x8a8] sm:$0xff]
      %v658 = vld [vmem:[#allocation6 + $0x8b0] sm:$0xff]
      %v659 = vld [vmem:[#allocation6 + $0x8b8] sm:$0xff]
      %v660 = vld [vmem:[#allocation6 + $0x8c0] sm:$0xff]
      %v661 = vld [vmem:[#allocation6 + $0x8c8] sm:$0xff]
      %v662 = vld [vmem:[#allocation6 + $0x8d0] sm:$0xff]
      %v663 = vld [vmem:[#allocation6 + $0x8d8] sm:$0xff]
      %v664 = vld [vmem:[#allocation6 + $0x8e0] sm:$0xff]
      %v665 = vld [vmem:[#allocation6 + $0x8e8] sm:$0xff]
      %v666 = vld [vmem:[#allocation6 + $0x8f0] sm:$0xff]
      %v667 = vld [vmem:[#allocation6 + $0x8f8] sm:$0xff]
      %v668 = vld [vmem:[#allocation6 + $0x900] sm:$0xff]
      %v669 = vld [vmem:[#allocation6 + $0x908] sm:$0xff]
      %v670 = vld [vmem:[#allocation6 + $0x910] sm:$0xff]
      %v671 = vld [vmem:[#allocation6 + $0x918] sm:$0xff]
      %v672 = vld [vmem:[#allocation6 + $0x920] sm:$0xff]
      %v673 = vld [vmem:[#allocation6 + $0x928] sm:$0xff]
      %v674 = vld [vmem:[#allocation6 + $0x930] sm:$0xff]
      %v675 = vld [vmem:[#allocation6 + $0x938] sm:$0xff]
      %v676 = vld [vmem:[#allocation6 + $0x940] sm:$0xff]
      %v677 = vld [vmem:[#allocation6 + $0x948] sm:$0xff]
      %v678 = vld [vmem:[#allocation6 + $0x950] sm:$0xff]
      %v679 = vld [vmem:[#allocation6 + $0x958] sm:$0xff]
      %v680 = vld [vmem:[#allocation6 + $0x960] sm:$0xff]
      %v681 = vld [vmem:[#allocation6 + $0x968] sm:$0xff]
      %v682 = vld [vmem:[#allocation6 + $0x970] sm:$0xff]
      %v683 = vld [vmem:[#allocation6 + $0x978] sm:$0xff]
      %v684 = vld [vmem:[#allocation6 + $0x980] sm:$0xff]
      %v685 = vld [vmem:[#allocation6 + $0x988] sm:$0xff]
      %v686 = vld [vmem:[#allocation6 + $0x990] sm:$0xff]
      %v687 = vld [vmem:[#allocation6 + $0x998] sm:$0xff]
      %v688 = vld [vmem:[#allocation6 + $0x9a0] sm:$0xff]
      %v689 = vld [vmem:[#allocation6 + $0x9a8] sm:$0xff]
      %v690 = vld [vmem:[#allocation6 + $0x9b0] sm:$0xff]
      %v691 = vld [vmem:[#allocation6 + $0x9b8] sm:$0xff]
      %v692 = vld [vmem:[#allocation6 + $0x9c0] sm:$0xff]
      %v693 = vld [vmem:[#allocation6 + $0x9c8] sm:$0xff]
      %v694 = vld [vmem:[#allocation6 + $0x9d0] sm:$0xff]
      %v695 = vld [vmem:[#allocation6 + $0x9d8] sm:$0xff]
      %v696 = vld [vmem:[#allocation6 + $0x9e0] sm:$0xff]
      %v697 = vld [vmem:[#allocation6 + $0x9e8] sm:$0xff]
      %v698 = vld [vmem:[#allocation6 + $0x9f0] sm:$0xff]
      %v699 = vld [vmem:[#allocation6 + $0x9f8] sm:$0xff]
      %v700 = vld [vmem:[#allocation6 + $0xa00] sm:$0xff]
      %v701 = vld [vmem:[#allocation6 + $0xa08] sm:$0xff]
      %v702 = vld [vmem:[#allocation6 + $0xa10] sm:$0xff]
      %v703 = vld [vmem:[#allocation6 + $0xa18] sm:$0xff]
      %v704 = vld [vmem:[#allocation6 + $0xa20] sm:$0xff]
      %v705 = vld [vmem:[#allocation6 + $0xa28] sm:$0xff]
      %v706 = vld [vmem:[#allocation6 + $0xa30] sm:$0xff]
      %v707 = vld [vmem:[#allocation6 + $0xa38] sm:$0xff]
      %v708 = vld [vmem:[#allocation6 + $0xa40] sm:$0xff]
      %v709 = vld [vmem:[#allocation6 + $0xa48] sm:$0xff]
      %v710 = vld [vmem:[#allocation6 + $0xa50] sm:$0xff]
      %v711 = vld [vmem:[#allocation6 + $0xa58] sm:$0xff]
      %v712 = vld [vmem:[#allocation6 + $0xa60] sm:$0xff]
      %v713 = vld [vmem:[#allocation6 + $0xa68] sm:$0xff]
      %v714 = vld [vmem:[#allocation6 + $0xa70] sm:$0xff]
      %v715 = vld [vmem:[#allocation6 + $0xa78] sm:$0xff]
      %v716 = vld [vmem:[#allocation6 + $0xa80] sm:$0xff]
      %v717 = vld [vmem:[#allocation6 + $0xa88] sm:$0xff]
      %v718 = vld [vmem:[#allocation6 + $0xa90] sm:$0xff]
      %v719 = vld [vmem:[#allocation6 + $0xa98] sm:$0xff]
      %v720 = vld [vmem:[#allocation6 + $0xaa0] sm:$0xff]
      %v721 = vld [vmem:[#allocation6 + $0xaa8] sm:$0xff]
      %v722 = vld [vmem:[#allocation6 + $0xab0] sm:$0xff]
      %v723 = vld [vmem:[#allocation6 + $0xab8] sm:$0xff]
      %v724 = vld [vmem:[#allocation6 + $0xac0] sm:$0xff]
      %v725 = vld [vmem:[#allocation6 + $0xac8] sm:$0xff]
      %v726 = vld [vmem:[#allocation6 + $0xad0] sm:$0xff]
      %v727 = vld [vmem:[#allocation6 + $0xad8] sm:$0xff]
      %v728 = vld [vmem:[#allocation6 + $0xae0] sm:$0xff]
      %v729 = vld [vmem:[#allocation6 + $0xae8] sm:$0xff]
      %v730 = vld [vmem:[#allocation6 + $0xaf0] sm:$0xff]
      %v731 = vld [vmem:[#allocation6 + $0xaf8] sm:$0xff]
      %v732 = vld [vmem:[#allocation6 + $0xb00] sm:$0xff]
      %v733 = vld [vmem:[#allocation6 + $0xb08] sm:$0xff]
      %v734 = vld [vmem:[#allocation6 + $0xb10] sm:$0xff]
      %v735 = vld [vmem:[#allocation6 + $0xb18] sm:$0xff]
      %v736 = vld [vmem:[#allocation6 + $0xb20] sm:$0xff]
      %v737 = vld [vmem:[#allocation6 + $0xb28] sm:$0xff]
      %v738 = vld [vmem:[#allocation6 + $0xb30] sm:$0xff]
      %v739 = vld [vmem:[#allocation6 + $0xb38] sm:$0xff]
      %v740 = vld [vmem:[#allocation6 + $0xb40] sm:$0xff]
      %v741 = vld [vmem:[#allocation6 + $0xb48] sm:$0xff]
      %v742 = vld [vmem:[#allocation6 + $0xb50] sm:$0xff]
      %v743 = vld [vmem:[#allocation6 + $0xb58] sm:$0xff]
      %v744 = vld [vmem:[#allocation6 + $0xb60] sm:$0xff]
      %v745 = vld [vmem:[#allocation6 + $0xb68] sm:$0xff]
      %v746 = vld [vmem:[#allocation6 + $0xb70] sm:$0xff]
      %v747 = vld [vmem:[#allocation6 + $0xb78] sm:$0xff]
      %v748 = vld [vmem:[#allocation6 + $0xb80] sm:$0xff]
      %v749 = vld [vmem:[#allocation6 + $0xb88] sm:$0xff]
      %v750 = vld [vmem:[#allocation6 + $0xb90] sm:$0xff]
      %v751 = vld [vmem:[#allocation6 + $0xb98] sm:$0xff]
      %v752 = vld [vmem:[#allocation6 + $0xba0] sm:$0xff]
      %v753 = vld [vmem:[#allocation6 + $0xba8] sm:$0xff]
      %v754 = vld [vmem:[#allocation6 + $0xbb0] sm:$0xff]
      %v755 = vld [vmem:[#allocation6 + $0xbb8] sm:$0xff]
      %v756 = vld [vmem:[#allocation6 + $0xbc0] sm:$0xff]
      %v757 = vld [vmem:[#allocation6 + $0xbc8] sm:$0xff]
      %v758 = vld [vmem:[#allocation6 + $0xbd0] sm:$0xff]
      %v759 = vld [vmem:[#allocation6 + $0xbd8] sm:$0xff]
      %v760 = vld [vmem:[#allocation6 + $0xbe0] sm:$0xff]
      %v761 = vld [vmem:[#allocation6 + $0xbe8] sm:$0xff]
      %v762 = vld [vmem:[#allocation6 + $0xbf0] sm:$0xff]
      %v763 = vld [vmem:[#allocation6 + $0xbf8] sm:$0xff]
      %v764 = vld [vmem:[#allocation8] sm:$0x3f]
      %v766 = vlaneseq
      %v767 = vshrl.u32 %v766, 7
      %v768 = vsub.s32 0, %v767
      %v769 = vrot.slane %v764, %v768
      %v770 = vlaneseq
      %v771 = vshrl.u32 %v770, 7
      %v772 = vsub.s32 1, %v771
      %v773 = vrot.slane %v764, %v772
      %v774 = vlaneseq
      %v775 = vshrl.u32 %v774, 7
      %v776 = vsub.s32 2, %v775
      %v777 = vrot.slane %v764, %v776
      %v778 = vlaneseq
      %v779 = vshrl.u32 %v778, 7
      %v780 = vsub.s32 3, %v779
      %v781 = vrot.slane %v764, %v780
      %v782 = vlaneseq
      %v783 = vshrl.u32 %v782, 7
      %v784 = vsub.s32 4, %v783
      %v785 = vrot.slane %v764, %v784
      %v786 = vlaneseq
      %v787 = vshrl.u32 %v786, 7
      %v788 = vsub.s32 5, %v787
      %v789 = vrot.slane %v764, %v788
      %796 = vmatprep.subr.mxu0 %v471
      %797 = vmatpush1.msra.mxu0 %v470
      %798 = vmatprep.subr.mxu0 %v465
      %799 = vmatpush1.msra.mxu0 %v464
      %800 = vmatprep.subr.mxu0 %v459
      %801 = vmatpush1.msra.mxu0 %v458
      %802 = vmatprep.subr.mxu0 %v453
      %803 = vmatpush1.msra.mxu0 %v452
      %804 = vmatprep.subr.mxu0 %v447
      %805 = vmatpush1.msra.mxu0 %v446
      %806 = vmatprep.subr.mxu0 %v441
      %807 = vmatpush1.msra.mxu0 %v440
      %808 = vmatprep.subr.mxu0 %v435
      %809 = vmatpush1.msra.mxu0 %v434
      %810 = vmatprep.subr.mxu0 %v429
      %811 = vmatpush1.msra.mxu0 %v428
      %812 = vmatprep.subr.mxu0 %v423
      %813 = vmatpush1.msra.mxu0 %v422
      %814 = vmatprep.subr.mxu0 %v417
      %815 = vmatpush1.msra.mxu0 %v416
      %816 = vmatprep.subr.mxu0 %v411
      %817 = vmatpush1.msra.mxu0 %v410
      %818 = vmatprep.subr.mxu0 %v405
      %819 = vmatpush1.msra.mxu0 %v404
      %820 = vmatprep.subr.mxu0 %v399
      %821 = vmatpush1.msra.mxu0 %v398
      %822 = vmatprep.subr.mxu0 %v393
      %823 = vmatpush1.msra.mxu0 %v392
      %824 = vmatprep.subr.mxu0 %v387
      %825 = vmatpush1.msra.mxu0 %v386
      %826 = vmatprep.subr.mxu0 %v381
      %827 = vmatpush1.msra.mxu0 %v380
      %828 = vmatprep.subr.mxu0 %v567
      %829 = vmatpush2.msra.mxu0 %v566
      %830 = vmatprep.subr.mxu0 %v561
      %831 = vmatpush2.msra.mxu0 %v560
      %832 = vmatprep.subr.mxu0 %v555
      %833 = vmatpush2.msra.mxu0 %v554
      %834 = vmatprep.subr.mxu0 %v549
      %835 = vmatpush2.msra.mxu0 %v548
      %836 = vmatprep.subr.mxu0 %v543
      %837 = vmatpush2.msra.mxu0 %v542
      %838 = vmatprep.subr.mxu0 %v537
      %839 = vmatpush2.msra.mxu0 %v536
      %840 = vmatprep.subr.mxu0 %v531
      %841 = vmatpush2.msra.mxu0 %v530
      %842 = vmatprep.subr.mxu0 %v525
      %843 = vmatpush2.msra.mxu0 %v524
      %844 = vmatprep.subr.mxu0 %v519
      %845 = vmatpush2.msra.mxu0 %v518
      %846 = vmatprep.subr.mxu0 %v513
      %847 = vmatpush2.msra.mxu0 %v512
      %848 = vmatprep.subr.mxu0 %v507
      %849 = vmatpush2.msra.mxu0 %v506
      %850 = vmatprep.subr.mxu0 %v501
      %851 = vmatpush2.msra.mxu0 %v500
      %852 = vmatprep.subr.mxu0 %v495
      %853 = vmatpush2.msra.mxu0 %v494
      %854 = vmatprep.subr.mxu0 %v489
      %855 = vmatpush2.msra.mxu0 %v488
      %856 = vmatprep.subr.mxu0 %v483
      %857 = vmatpush2.msra.mxu0 %v482
      %858 = vmatprep.subr.mxu0 %v477
      %859 = vmatpush2.msra.mxu0 %v476
      %860 = vmatprep.mubr.f32.mxu0 %v377
      %861 = vmatmul.mubr.f32.gmra.mxu0 %v376
      %v862 = vpop.f32.mrf.mxu0
      %v863 = vadd.f32 %v769, %v862
      %v864 = vpop.f32.mrf.mxu0
      %v865 = vadd.f32 %v773, %v864
      %866 = vdwg.mxu0
      %867 = vmatprep.subr.mxu0 %v663
      %868 = vmatpush1.msra.mxu0 %v662
      %869 = vmatprep.subr.mxu0 %v657
      %870 = vmatpush1.msra.mxu0 %v656
      %871 = vmatprep.subr.mxu0 %v651
      %872 = vmatpush1.msra.mxu0 %v650
      %873 = vmatprep.subr.mxu0 %v645
      %874 = vmatpush1.msra.mxu0 %v644
      %875 = vmatprep.subr.mxu0 %v639
      %876 = vmatpush1.msra.mxu0 %v638
      %877 = vmatprep.subr.mxu0 %v633
      %878 = vmatpush1.msra.mxu0 %v632
      %879 = vmatprep.subr.mxu0 %v627
      %880 = vmatpush1.msra.mxu0 %v626
      %881 = vmatprep.subr.mxu0 %v621
      %882 = vmatpush1.msra.mxu0 %v620
      %883 = vmatprep.subr.mxu0 %v615
      %884 = vmatpush1.msra.mxu0 %v614
      %885 = vmatprep.subr.mxu0 %v609
      %886 = vmatpush1.msra.mxu0 %v608
      %887 = vmatprep.subr.mxu0 %v603
      %888 = vmatpush1.msra.mxu0 %v602
      %889 = vmatprep.subr.mxu0 %v597
      %890 = vmatpush1.msra.mxu0 %v596
      %891 = vmatprep.subr.mxu0 %v591
      %892 = vmatpush1.msra.mxu0 %v590
      %893 = vmatprep.subr.mxu0 %v585
      %894 = vmatpush1.msra.mxu0 %v584
      %895 = vmatprep.subr.mxu0 %v579
      %896 = vmatpush1.msra.mxu0 %v578
      %897 = vmatprep.subr.mxu0 %v573
      %898 = vmatpush1.msra.mxu0 %v572
      %899 = vmatprep.subr.mxu0 %v759
      %900 = vmatpush2.msra.mxu0 %v758
      %901 = vmatprep.subr.mxu0 %v753
      %902 = vmatpush2.msra.mxu0 %v752
      %903 = vmatprep.subr.mxu0 %v747
      %904 = vmatpush2.msra.mxu0 %v746
      %905 = vmatprep.subr.mxu0 %v741
      %906 = vmatpush2.msra.mxu0 %v740
      %907 = vmatprep.subr.mxu0 %v735
      %908 = vmatpush2.msra.mxu0 %v734
      %909 = vmatprep.subr.mxu0 %v729
      %910 = vmatpush2.msra.mxu0 %v728
      %911 = vmatprep.subr.mxu0 %v723
      %912 = vmatpush2.msra.mxu0 %v722
      %913 = vmatprep.subr.mxu0 %v717
      %914 = vmatpush2.msra.mxu0 %v716
      %915 = vmatprep.subr.mxu0 %v711
      %916 = vmatpush2.msra.mxu0 %v710
      %917 = vmatprep.subr.mxu0 %v705
      %918 = vmatpush2.msra.mxu0 %v704
      %919 = vmatprep.subr.mxu0 %v699
      %920 = vmatpush2.msra.mxu0 %v698
      %921 = vmatprep.subr.mxu0 %v693
      %922 = vmatpush2.msra.mxu0 %v692
      %923 = vmatprep.subr.mxu0 %v687
      %924 = vmatpush2.msra.mxu0 %v686
      %925 = vmatprep.subr.mxu0 %v681
      %926 = vmatpush2.msra.mxu0 %v680
      %927 = vmatprep.subr.mxu0 %v675
      %928 = vmatpush2.msra.mxu0 %v674
      %929 = vmatprep.subr.mxu0 %v669
      %930 = vmatpush2.msra.mxu0 %v668
      %931 = vmatprep.mubr.f32.mxu0 %v379
      %932 = vmatmul.mubr.f32.gmra.mxu0 %v378
      %v933 = vpop.f32.mrf.mxu0
      %v934 = vadd.f32 %v863, %v933
      %v935 = vpop.f32.mrf.mxu0
      %v936 = vadd.f32 %v865, %v935
      %937 = vdwg.mxu0
      %938 = vmatprep.subr.mxu0 %v473
      %939 = vmatpush1.msra.mxu0 %v472
      %940 = vmatprep.subr.mxu0 %v467
      %941 = vmatpush1.msra.mxu0 %v466
      %942 = vmatprep.subr.mxu0 %v461
      %943 = vmatpush1.msra.mxu0 %v460
      %944 = vmatprep.subr.mxu0 %v455
      %945 = vmatpush1.msra.mxu0 %v454
      %946 = vmatprep.subr.mxu0 %v449
      %947 = vmatpush1.msra.mxu0 %v448
      %948 = vmatprep.subr.mxu0 %v443
      %949 = vmatpush1.msra.mxu0 %v442
      %950 = vmatprep.subr.mxu0 %v437
      %951 = vmatpush1.msra.mxu0 %v436
      %952 = vmatprep.subr.mxu0 %v431
      %953 = vmatpush1.msra.mxu0 %v430
      %954 = vmatprep.subr.mxu0 %v425
      %955 = vmatpush1.msra.mxu0 %v424
      %956 = vmatprep.subr.mxu0 %v419
      %957 = vmatpush1.msra.mxu0 %v418
      %958 = vmatprep.subr.mxu0 %v413
      %959 = vmatpush1.msra.mxu0 %v412
      %960 = vmatprep.subr.mxu0 %v407
      %961 = vmatpush1.msra.mxu0 %v406
      %962 = vmatprep.subr.mxu0 %v401
      %963 = vmatpush1.msra.mxu0 %v400
      %964 = vmatprep.subr.mxu0 %v395
      %965 = vmatpush1.msra.mxu0 %v394
      %966 = vmatprep.subr.mxu0 %v389
      %967 = vmatpush1.msra.mxu0 %v388
      %968 = vmatprep.subr.mxu0 %v383
      %969 = vmatpush1.msra.mxu0 %v382
      %970 = vmatprep.subr.mxu0 %v569
      %971 = vmatpush2.msra.mxu0 %v568
      %972 = vmatprep.subr.mxu0 %v563
      %973 = vmatpush2.msra.mxu0 %v562
      %974 = vmatprep.subr.mxu0 %v557
      %975 = vmatpush2.msra.mxu0 %v556
      %976 = vmatprep.subr.mxu0 %v551
      %977 = vmatpush2.msra.mxu0 %v550
      %978 = vmatprep.subr.mxu0 %v545
      %979 = vmatpush2.msra.mxu0 %v544
      %980 = vmatprep.subr.mxu0 %v539
      %981 = vmatpush2.msra.mxu0 %v538
      %982 = vmatprep.subr.mxu0 %v533
      %983 = vmatpush2.msra.mxu0 %v532
      %984 = vmatprep.subr.mxu0 %v527
      %985 = vmatpush2.msra.mxu0 %v526
      %986 = vmatprep.subr.mxu0 %v521
      %987 = vmatpush2.msra.mxu0 %v520
      %988 = vmatprep.subr.mxu0 %v515
      %989 = vmatpush2.msra.mxu0 %v514
      %990 = vmatprep.subr.mxu0 %v509
      %991 = vmatpush2.msra.mxu0 %v508
      %992 = vmatprep.subr.mxu0 %v503
      %993 = vmatpush2.msra.mxu0 %v502
      %994 = vmatprep.subr.mxu0 %v497
      %995 = vmatpush2.msra.mxu0 %v496
      %996 = vmatprep.subr.mxu0 %v491
      %997 = vmatpush2.msra.mxu0 %v490
      %998 = vmatprep.subr.mxu0 %v485
      %999 = vmatpush2.msra.mxu0 %v484
      %1000 = vmatprep.subr.mxu0 %v479
      %1001 = vmatpush2.msra.mxu0 %v478
      %1002 = vmatprep.mubr.f32.mxu0 %v377
      %1003 = vmatmul.mubr.f32.gmra.mxu0 %v376
      %v1004 = vpop.f32.mrf.mxu0
      %v1005 = vadd.f32 %v777, %v1004
      %v1006 = vpop.f32.mrf.mxu0
      %v1007 = vadd.f32 %v781, %v1006
      %1008 = vdwg.mxu0
      %1009 = vmatprep.subr.mxu0 %v665
      %1010 = vmatpush1.msra.mxu0 %v664
      %1011 = vmatprep.subr.mxu0 %v659
      %1012 = vmatpush1.msra.mxu0 %v658
      %1013 = vmatprep.subr.mxu0 %v653
      %1014 = vmatpush1.msra.mxu0 %v652
      %1015 = vmatprep.subr.mxu0 %v647
      %1016 = vmatpush1.msra.mxu0 %v646
      %1017 = vmatprep.subr.mxu0 %v641
      %1018 = vmatpush1.msra.mxu0 %v640
      %1019 = vmatprep.subr.mxu0 %v635
      %1020 = vmatpush1.msra.mxu0 %v634
      %1021 = vmatprep.subr.mxu0 %v629
      %1022 = vmatpush1.msra.mxu0 %v628
      %1023 = vmatprep.subr.mxu0 %v623
      %1024 = vmatpush1.msra.mxu0 %v622
      %1025 = vmatprep.subr.mxu0 %v617
      %1026 = vmatpush1.msra.mxu0 %v616
      %1027 = vmatprep.subr.mxu0 %v611
      %1028 = vmatpush1.msra.mxu0 %v610
      %1029 = vmatprep.subr.mxu0 %v605
      %1030 = vmatpush1.msra.mxu0 %v604
      %1031 = vmatprep.subr.mxu0 %v599
      %1032 = vmatpush1.msra.mxu0 %v598
      %1033 = vmatprep.subr.mxu0 %v593
      %1034 = vmatpush1.msra.mxu0 %v592
      %1035 = vmatprep.subr.mxu0 %v587
      %1036 = vmatpush1.msra.mxu0 %v586
      %1037 = vmatprep.subr.mxu0 %v581
      %1038 = vmatpush1.msra.mxu0 %v580
      %1039 = vmatprep.subr.mxu0 %v575
      %1040 = vmatpush1.msra.mxu0 %v574
      %1041 = vmatprep.subr.mxu0 %v761
      %1042 = vmatpush2.msra.mxu0 %v760
      %1043 = vmatprep.subr.mxu0 %v755
      %1044 = vmatpush2.msra.mxu0 %v754
      %1045 = vmatprep.subr.mxu0 %v749
      %1046 = vmatpush2.msra.mxu0 %v748
      %1047 = vmatprep.subr.mxu0 %v743
      %1048 = vmatpush2.msra.mxu0 %v742
      %1049 = vmatprep.subr.mxu0 %v737
      %1050 = vmatpush2.msra.mxu0 %v736
      %1051 = vmatprep.subr.mxu0 %v731
      %1052 = vmatpush2.msra.mxu0 %v730
      %1053 = vmatprep.subr.mxu0 %v725
      %1054 = vmatpush2.msra.mxu0 %v724
      %1055 = vmatprep.subr.mxu0 %v719
      %1056 = vmatpush2.msra.mxu0 %v718
      %1057 = vmatprep.subr.mxu0 %v713
      %1058 = vmatpush2.msra.mxu0 %v712
      %1059 = vmatprep.subr.mxu0 %v707
      %1060 = vmatpush2.msra.mxu0 %v706
      %1061 = vmatprep.subr.mxu0 %v701
      %1062 = vmatpush2.msra.mxu0 %v700
      %1063 = vmatprep.subr.mxu0 %v695
      %1064 = vmatpush2.msra.mxu0 %v694
      %1065 = vmatprep.subr.mxu0 %v689
      %1066 = vmatpush2.msra.mxu0 %v688
      %1067 = vmatprep.subr.mxu0 %v683
      %1068 = vmatpush2.msra.mxu0 %v682
      %1069 = vmatprep.subr.mxu0 %v677
      %1070 = vmatpush2.msra.mxu0 %v676
      %1071 = vmatprep.subr.mxu0 %v671
      %1072 = vmatpush2.msra.mxu0 %v670
      %1073 = vmatprep.mubr.f32.mxu0 %v379
      %1074 = vmatmul.mubr.f32.gmra.mxu0 %v378
      %v1075 = vpop.f32.mrf.mxu0
      %v1076 = vadd.f32 %v1005, %v1075
      %v1077 = vpop.f32.mrf.mxu0
      %v1078 = vadd.f32 %v1007, %v1077
      %1079 = vdwg.mxu0
      %1080 = vmatprep.subr.mxu0 %v475
      %1081 = vmatpush1.msra.mxu0 %v474
      %1082 = vmatprep.subr.mxu0 %v469
      %1083 = vmatpush1.msra.mxu0 %v468
      %1084 = vmatprep.subr.mxu0 %v463
      %1085 = vmatpush1.msra.mxu0 %v462
      %1086 = vmatprep.subr.mxu0 %v457
      %1087 = vmatpush1.msra.mxu0 %v456
      %1088 = vmatprep.subr.mxu0 %v451
      %1089 = vmatpush1.msra.mxu0 %v450
      %1090 = vmatprep.subr.mxu0 %v445
      %1091 = vmatpush1.msra.mxu0 %v444
      %1092 = vmatprep.subr.mxu0 %v439
      %1093 = vmatpush1.msra.mxu0 %v438
      %1094 = vmatprep.subr.mxu0 %v433
      %1095 = vmatpush1.msra.mxu0 %v432
      %1096 = vmatprep.subr.mxu0 %v427
      %1097 = vmatpush1.msra.mxu0 %v426
      %1098 = vmatprep.subr.mxu0 %v421
      %1099 = vmatpush1.msra.mxu0 %v420
      %1100 = vmatprep.subr.mxu0 %v415
      %1101 = vmatpush1.msra.mxu0 %v414
      %1102 = vmatprep.subr.mxu0 %v409
      %1103 = vmatpush1.msra.mxu0 %v408
      %1104 = vmatprep.subr.mxu0 %v403
      %1105 = vmatpush1.msra.mxu0 %v402
      %1106 = vmatprep.subr.mxu0 %v397
      %1107 = vmatpush1.msra.mxu0 %v396
      %1108 = vmatprep.subr.mxu0 %v391
      %1109 = vmatpush1.msra.mxu0 %v390
      %1110 = vmatprep.subr.mxu0 %v385
      %1111 = vmatpush1.msra.mxu0 %v384
      %1112 = vmatprep.subr.mxu0 %v571
      %1113 = vmatpush2.msra.mxu0 %v570
      %1114 = vmatprep.subr.mxu0 %v565
      %1115 = vmatpush2.msra.mxu0 %v564
      %1116 = vmatprep.subr.mxu0 %v559
      %1117 = vmatpush2.msra.mxu0 %v558
      %1118 = vmatprep.subr.mxu0 %v553
      %1119 = vmatpush2.msra.mxu0 %v552
      %1120 = vmatprep.subr.mxu0 %v547
      %1121 = vmatpush2.msra.mxu0 %v546
      %1122 = vmatprep.subr.mxu0 %v541
      %1123 = vmatpush2.msra.mxu0 %v540
      %1124 = vmatprep.subr.mxu0 %v535
      %1125 = vmatpush2.msra.mxu0 %v534
      %1126 = vmatprep.subr.mxu0 %v529
      %1127 = vmatpush2.msra.mxu0 %v528
      %1128 = vmatprep.subr.mxu0 %v523
      %1129 = vmatpush2.msra.mxu0 %v522
      %1130 = vmatprep.subr.mxu0 %v517
      %1131 = vmatpush2.msra.mxu0 %v516
      %1132 = vmatprep.subr.mxu0 %v511
      %1133 = vmatpush2.msra.mxu0 %v510
      %1134 = vmatprep.subr.mxu0 %v505
      %1135 = vmatpush2.msra.mxu0 %v504
      %1136 = vmatprep.subr.mxu0 %v499
      %1137 = vmatpush2.msra.mxu0 %v498
      %1138 = vmatprep.subr.mxu0 %v493
      %1139 = vmatpush2.msra.mxu0 %v492
      %1140 = vmatprep.subr.mxu0 %v487
      %1141 = vmatpush2.msra.mxu0 %v486
      %1142 = vmatprep.subr.mxu0 %v481
      %1143 = vmatpush2.msra.mxu0 %v480
      %1144 = vmatprep.mubr.f32.mxu0 %v377
      %1145 = vmatmul.mubr.f32.gmra.mxu0 %v376
      %v1146 = vpop.f32.mrf.mxu0
      %v1147 = vadd.f32 %v785, %v1146
      %v1148 = vpop.f32.mrf.mxu0
      %v1149 = vadd.f32 %v789, %v1148
      %1150 = vdwg.mxu0
      %1151 = vmatprep.subr.mxu0 %v667
      %1152 = vmatpush1.msra.mxu0 %v666
      %1153 = vmatprep.subr.mxu0 %v661
      %1154 = vmatpush1.msra.mxu0 %v660
      %1155 = vmatprep.subr.mxu0 %v655
      %1156 = vmatpush1.msra.mxu0 %v654
      %1157 = vmatprep.subr.mxu0 %v649
      %1158 = vmatpush1.msra.mxu0 %v648
      %1159 = vmatprep.subr.mxu0 %v643
      %1160 = vmatpush1.msra.mxu0 %v642
      %1161 = vmatprep.subr.mxu0 %v637
      %1162 = vmatpush1.msra.mxu0 %v636
      %1163 = vmatprep.subr.mxu0 %v631
      %1164 = vmatpush1.msra.mxu0 %v630
      %1165 = vmatprep.subr.mxu0 %v625
      %1166 = vmatpush1.msra.mxu0 %v624
      %1167 = vmatprep.subr.mxu0 %v619
      %1168 = vmatpush1.msra.mxu0 %v618
      %1169 = vmatprep.subr.mxu0 %v613
      %1170 = vmatpush1.msra.mxu0 %v612
      %1171 = vmatprep.subr.mxu0 %v607
      %1172 = vmatpush1.msra.mxu0 %v606
      %1173 = vmatprep.subr.mxu0 %v601
      %1174 = vmatpush1.msra.mxu0 %v600
      %1175 = vmatprep.subr.mxu0 %v595
      %1176 = vmatpush1.msra.mxu0 %v594
      %1177 = vmatprep.subr.mxu0 %v589
      %1178 = vmatpush1.msra.mxu0 %v588
      %1179 = vmatprep.subr.mxu0 %v583
      %1180 = vmatpush1.msra.mxu0 %v582
      %1181 = vmatprep.subr.mxu0 %v577
      %1182 = vmatpush1.msra.mxu0 %v576
      %1183 = vmatprep.subr.mxu0 %v763
      %1184 = vmatpush2.msra.mxu0 %v762
      %1185 = vmatprep.subr.mxu0 %v757
      %1186 = vmatpush2.msra.mxu0 %v756
      %1187 = vmatprep.subr.mxu0 %v751
      %1188 = vmatpush2.msra.mxu0 %v750
      %1189 = vmatprep.subr.mxu0 %v745
      %1190 = vmatpush2.msra.mxu0 %v744
      %1191 = vmatprep.subr.mxu0 %v739
      %1192 = vmatpush2.msra.mxu0 %v738
      %1193 = vmatprep.subr.mxu0 %v733
      %1194 = vmatpush2.msra.mxu0 %v732
      %1195 = vmatprep.subr.mxu0 %v727
      %1196 = vmatpush2.msra.mxu0 %v726
      %1197 = vmatprep.subr.mxu0 %v721
      %1198 = vmatpush2.msra.mxu0 %v720
      %1199 = vmatprep.subr.mxu0 %v715
      %1200 = vmatpush2.msra.mxu0 %v714
      %1201 = vmatprep.subr.mxu0 %v709
      %1202 = vmatpush2.msra.mxu0 %v708
      %1203 = vmatprep.subr.mxu0 %v703
      %1204 = vmatpush2.msra.mxu0 %v702
      %1205 = vmatprep.subr.mxu0 %v697
      %1206 = vmatpush2.msra.mxu0 %v696
      %1207 = vmatprep.subr.mxu0 %v691
      %1208 = vmatpush2.msra.mxu0 %v690
      %1209 = vmatprep.subr.mxu0 %v685
      %1210 = vmatpush2.msra.mxu0 %v684
      %1211 = vmatprep.subr.mxu0 %v679
      %1212 = vmatpush2.msra.mxu0 %v678
      %1213 = vmatprep.subr.mxu0 %v673
      %1214 = vmatpush2.msra.mxu0 %v672
      %1215 = vmatprep.mubr.f32.mxu0 %v379
      %1216 = vmatmul.mubr.f32.gmra.mxu0 %v378
      %v1217 = vpop.f32.mrf.mxu0
      %v1218 = vadd.f32 %v1147, %v1217
      %v1219 = vpop.f32.mrf.mxu0
      %v1220 = vadd.f32 %v1149, %v1219
      %1221 = vdwg.mxu0
      %v1228 = vcombine.low %v934, %v936
      %v1229 = vcombine.high %v934, %v936
      %v1230 = vcombine.low %v1076, %v1078
      %v1231 = vcombine.high %v1076, %v1078
      %v1233 = vunpack.c.l.s4 1983009808
      %v1234 = vunpack.c.0.s8 %v1233
      %v1235 = vlaneseq
      %v1236 = vshrl.u32 %v1235, 7
      %v1237 = vsub.s32 %v1234, %v1236
      %v1238 = vrot.slane %v1228, %v1237
      %v1240 = vunpack.c.l.s4 1983009808
      %v1241 = vunpack.c.0.s8 %v1240
      %v1242 = vlaneseq
      %v1243 = vshrl.u32 %v1242, 7
      %v1244 = vsub.s32 %v1241, %v1243
      %v1245 = vrot.slane %v1229, %v1244
      %v1247 = vunpack.c.l.s4 1983009808
      %v1248 = vunpack.c.0.s8 %v1247
      %v1249 = vlaneseq
      %v1250 = vshrl.u32 %v1249, 7
      %v1251 = vsub.s32 %v1248, %v1250
      %v1252 = vrot.slane %v1230, %v1251
      %v1254 = vunpack.c.l.s4 1983009808
      %v1255 = vunpack.c.0.s8 %v1254
      %v1256 = vlaneseq
      %v1257 = vshrl.u32 %v1256, 7
      %v1258 = vsub.s32 %v1255, %v1257
      %v1259 = vrot.slane %v1231, %v1258
      %v1260 = vcombine.low %v1238, %v1252
      %v1261 = vcombine.high %v1238, %v1252
      %v1262 = vcombine.low %v1245, %v1259
      %v1263 = vcombine.high %v1245, %v1259
      %v1264 = vcombine.low %v1218, %v1220
      %v1265 = vcombine.high %v1218, %v1220
      %v1267 = vunpack.c.l.s4 1983009808
      %v1268 = vunpack.c.0.s8 %v1267
      %v1269 = vlaneseq
      %v1270 = vshrl.u32 %v1269, 7
      %v1271 = vsub.s32 %v1268, %v1270
      %v1272 = vrot.slane %v1264, %v1271
      %v1274 = vunpack.c.l.s4 1983009808
      %v1275 = vunpack.c.0.s8 %v1274
      %v1276 = vlaneseq
      %v1277 = vshrl.u32 %v1276, 7
      %v1278 = vsub.s32 %v1275, %v1277
      %v1279 = vrot.slane %v1265, %v1278
      %v1280 = vcombine.high %v1272, %v1272
      %v1281 = vcombine.high %v1279, %v1279
      %1290 = vst [vmem:[#allocation9] sm:$0xff] %v1260
      %1291 = vst [vmem:[#allocation9 + $0x8] sm:$0xf] %v1272
      %1292 = vst [vmem:[#allocation9 + $0xc] sm:$0xff] %v1261
      %1293 = vst [vmem:[#allocation9 + $0x14] sm:$0xf] %v1280
      %1294 = vst [vmem:[#allocation9 + $0x18] sm:$0xff] %v1262
      %1295 = vst [vmem:[#allocation9 + $0x20] sm:$0xf] %v1279
      %1296 = vst [vmem:[#allocation9 + $0x24] sm:$0xff] %v1263
      %1297 = vst [vmem:[#allocation9 + $0x2c] sm:$0xf] %v1281
    $region33: #{tpu_custom_call.1} parent=1 // pred_fallthru
      _
    // Predicated region
    $region34: #{tpu_custom_call.1} parent=1 // pred_check
      _
    $region35: #{tpu_custom_call.1} parent=1 // pred_check_branch
      %1299 = sbr.rel (0) target = $region37
    $region36: #{tpu_custom_call.1} parent=1 // pred_region
      %s1301 = ssub.s32 768, 192
      %1302 = vsyncadd [#allocation5], %s1301
      %s1303 = sshll.u32 [#allocation9], 4
      %s1304 = int_to_ptr.vmem [resolvable:$true] %s1303
      %1309 = dma.vmem_to_hbm [thread:$0]  %s1304, 192, %s3, [#allocation5], 192, 192, 12
    $region37: #{tpu_custom_call.1} parent=1 // pred_fallthru
      _
    // Predicated region
    $region38: #{tpu_custom_call.1} parent=1 // pred_check
      _
    $region39: #{tpu_custom_call.1} parent=1 // pred_check_branch
      %1311 = sbr.rel (0) target = $region41
    $region40: #{tpu_custom_call.1} parent=1 // pred_region
      %1312 = dma.done [#allocation5], 768
    $region41: #{tpu_custom_call.1} parent=1 // pred_fallthru
      _
    %1313 = vsyncpa [#allocation4], 1
    %1314 = vsyncpa [#allocation7], 1
    %1315 = vsyncpa [#allocation5], 1

// kernel: tpu_custom_call.1
$region0: #{tpu_custom_call.1}
  #allocation0 [shape = 'u32[]', space=smem, size = 0x4, offset = 0x4, fixed_abs, tag = 'smem constant byte address 0x4 - core index']
  #allocation1 [shape = 'u32[144,128]{1,0:T(1,128)}', space=vmem, size = 0x12000, scoped, tag = 'internal scratch']
  #allocation2 [shape = 'f32[8,512]{1,0:T(8,128)}', space=vmem, size = 0x4000, scoped, tag = 'scratch operand']
  %s0 = inlined_call_operand.hbm [shape: f32[2,8,512], index: 0, kind: input, shape index: {}]
  %s1 = inlined_call_operand.hbm [shape: f32[512,768], index: 1, kind: input, shape index: {}]
  %s2 = inlined_call_operand.hbm [shape: f32[1,768], index: 2, kind: input, shape index: {}]
  %s3 = inlined_call_operand.hbm [shape: f32[2,768], index: 3, kind: output, shape index: {}]
  %s4 = sld [smem:[#allocation0]]
  $region42: #{tpu_custom_call.1} parent=0
    _
  %s6 = ssub.s32 1, %s4
  %s7 = scalar_select 0, %s6, %s4
  $region1: #{tpu_custom_call.1} parent=0
    #allocation3 [shape = 'u8[131072]{0}', space=vmem, size = 0x20000, scoped, tag = 'input window, operand 0, single buffered']
    #allocation4 [shape = 's32[1]{0}', space=sflag, size = 0x4, scoped, tag = 'scoped memory for tpu_custom_call.1']
    #allocation5 [shape = 's32[1]{0}', space=sflag, size = 0x4, scoped, tag = 'scoped memory for tpu_custom_call.1']
    #allocation6 [shape = 'u8[1572864]{0}', space=vmem, size = 0x180000, scoped, tag = 'input window, operand 1, single buffered']
    #allocation7 [shape = 's32[1]{0}', space=sflag, size = 0x4, scoped, tag = 'scoped memory for tpu_custom_call.1']
    #allocation8 [shape = 'u8[3072]{0}', space=vmem, size = 0xc00, scoped, tag = 'input window, operand 2, single buffered']
    #allocation9 [shape = 'u8[24576]{0}', space=vmem, size = 0x6000, scoped, tag = 'output window, operand 0, single buffered']
    %8 = vsyncpa [#allocation4], 0
    %9 = vsyncpa [#allocation7], 0
    %10 = vsyncpa [#allocation5], 0
    // Predicated region
    $region2: #{tpu_custom_call.1} parent=1 // pred_check
      _
    $region3: #{tpu_custom_call.1} parent=1 // pred_check_branch
      %12 = sbr.rel (0) target = $region5
    $region4: #{tpu_custom_call.1} parent=1 // pred_region
      %s14 = ssub.s32 4096, 1024
      %15 = vsyncadd [#allocation4], %s14
      %s16 = sshll.u32 [#allocation3], 4
      %s17 = int_to_ptr.vmem [resolvable:$true] %s16
      %22 = dma.hbm_to_vmem [thread:$0]  %s0, 1024, %s17, [#allocation4], 512, 512, 32
    $region5: #{tpu_custom_call.1} parent=1 // pred_fallthru
      _
    // Predicated region
    $region6: #{tpu_custom_call.1} parent=1 // pred_check
      _
    $region7: #{tpu_custom_call.1} parent=1 // pred_check_branch
      %24 = sbr.rel (0) target = $region9
    $region8: #{tpu_custom_call.1} parent=1 // pred_region
      %s26 = ssub.s32 49152, 49152
      %27 = vsyncadd [#allocation7], %s26
      %s28 = sshll.u32 [#allocation6], 4
      %s29 = int_to_ptr.vmem [resolvable:$true] %s28
      %34 = dma.hbm_to_vmem [thread:$0]  %s1, 49152, %s29, [#allocation7], 768, 768, 48
    $region9: #{tpu_custom_call.1} parent=1 // pred_fallthru
      _
    // Predicated region
    $region10: #{tpu_custom_call.1} parent=1 // pred_check
      _
    $region11: #{tpu_custom_call.1} parent=1 // pred_check_branch
      %36 = sbr.rel (0) target = $region13
    $region12: #{tpu_custom_call.1} parent=1 // pred_region
      %s38 = ssub.s32 96, 96
      %39 = vsyncadd [#allocation7], %s38
      %s41 = sshll.u32 [#allocation8], 4
      %s42 = int_to_ptr.vmem [resolvable:$true] %s41
      %44 = dma.hbm_to_vmem [thread:$0]  %s2, 96, %s42, [#allocation7]
    $region13: #{tpu_custom_call.1} parent=1 // pred_fallthru
      _
    // Predicated region
    $region14: #{tpu_custom_call.1} parent=1 // pred_check
      _
    $region15: #{tpu_custom_call.1} parent=1 // pred_check_branch
      %46 = sbr.rel (0) target = $region17
    $region16: #{tpu_custom_call.1} parent=1 // pred_region
      %47 = dma.done [#allocation4], 4096
    $region17: #{tpu_custom_call.1} parent=1 // pred_fallthru
      _
    // Predicated region
    $region18: #{tpu_custom_call.1} parent=1 // pred_check
      _
    $region19: #{tpu_custom_call.1} parent=1 // pred_check_branch
      %49 = sbr.rel (0) target = $region21
    $region20: #{tpu_custom_call.1} parent=1 // pred_region
      %50 = dma.done [#allocation7], 49152
    $region21: #{tpu_custom_call.1} parent=1 // pred_fallthru
      _
    // Predicated region
    $region22: #{tpu_custom_call.1} parent=1 // pred_check
      _
    $region23: #{tpu_custom_call.1} parent=1 // pred_check_branch
      %52 = sbr.rel (0) target = $region25
    $region24: #{tpu_custom_call.1} parent=1 // pred_region
      %53 = dma.done [#allocation7], 96
    $region25: #{tpu_custom_call.1} parent=1 // pred_fallthru
      _
    %p54 = scmp.eq.s32.totalorder 0, 0
    // Predicated region
    $region26: #{tpu_custom_call.1} parent=1 // pred_check
      %p55 = pneg %p54
    $region27: #{tpu_custom_call.1} parent=1 // pred_check_branch
      %57 = sbr.rel (%p55) target = $region29
    $region28: #{tpu_custom_call.1} parent=1 // pred_region
      %58 = vst [vmem:[#allocation2] sm:$0xff] 0.0
      %59 = vst [vmem:[#allocation2 + $0x8] sm:$0xff] 0.0
      %60 = vst [vmem:[#allocation2 + $0x10] sm:$0xff] 0.0
      %61 = vst [vmem:[#allocation2 + $0x18] sm:$0xff] 0.0
    $region29: #{tpu_custom_call.1} parent=1 // pred_fallthru
      _
    %v62 = vld [vmem:[#allocation3] sm:$0xff]
    %v63 = vld [vmem:[#allocation3 + $0x8] sm:$0xff]
    %v64 = vld [vmem:[#allocation3 + $0x10] sm:$0xff]
    %v65 = vld [vmem:[#allocation3 + $0x18] sm:$0xff]
    %v66 = vld [vmem:[#allocation3 + $0x20] sm:$0xff]
    %v67 = vld [vmem:[#allocation3 + $0x28] sm:$0xff]
    %v68 = vld [vmem:[#allocation3 + $0x30] sm:$0xff]
    %v69 = vld [vmem:[#allocation3 + $0x38] sm:$0xff]
    %v70 = vld [vmem:[#allocation3 + $0x40] sm:$0xff]
    %v71 = vld [vmem:[#allocation3 + $0x48] sm:$0xff]
    %v72 = vld [vmem:[#allocation3 + $0x50] sm:$0xff]
    %v73 = vld [vmem:[#allocation3 + $0x58] sm:$0xff]
    %v74 = vld [vmem:[#allocation3 + $0x60] sm:$0xff]
    %v75 = vld [vmem:[#allocation3 + $0x68] sm:$0xff]
    %v76 = vld [vmem:[#allocation3 + $0x70] sm:$0xff]
    %v77 = vld [vmem:[#allocation3 + $0x78] sm:$0xff]
    %v78 = vld [vmem:[#allocation3 + $0x80] sm:$0xff]
    %v79 = vld [vmem:[#allocation3 + $0x88] sm:$0xff]
    %v80 = vld [vmem:[#allocation3 + $0x90] sm:$0xff]
    %v81 = vld [vmem:[#allocation3 + $0x98] sm:$0xff]
    %v82 = vld [vmem:[#allocation3 + $0xa0] sm:$0xff]
    %v83 = vld [vmem:[#allocation3 + $0xa8] sm:$0xff]
    %v84 = vld [vmem:[#allocation3 + $0xb0] sm:$0xff]
    %v85 = vld [vmem:[#allocation3 + $0xb8] sm:$0xff]
    %v86 = vld [vmem:[#allocation3 + $0xc0] sm:$0xff]
    %v87 = vld [vmem:[#allocation3 + $0xc8] sm:$0xff]
    %v88 = vld [vmem:[#allocation3 + $0xd0] sm:$0xff]
    %v89 = vld [vmem:[#allocation3 + $0xd8] sm:$0xff]
    %v90 = vld [vmem:[#allocation3 + $0xe0] sm:$0xff]
    %v91 = vld [vmem:[#allocation3 + $0xe8] sm:$0xff]
    %v92 = vld [vmem:[#allocation3 + $0xf0] sm:$0xff]
    %v93 = vld [vmem:[#allocation3 + $0xf8] sm:$0xff]
    %v94 = vld [vmem:[#allocation2] sm:$0xff]
    %v95 = vld [vmem:[#allocation2 + $0x8] sm:$0xff]
    %v96 = vld [vmem:[#allocation2 + $0x10] sm:$0xff]
    %v97 = vld [vmem:[#allocation2 + $0x18] sm:$0xff]
    %v98 = vrot.slane %v62, 4
    %v99 = vadd.f32 %v62, %v98
    %v100 = vrot.slane %v99, 2
    %v101 = vadd.f32 %v99, %v100
    %v102 = vrot.slane %v101, 1
    %v103 = vadd.f32 %v101, %v102
    %v104 = vrot.slane %v63, 4
    %v105 = vadd.f32 %v63, %v104
    %v106 = vrot.slane %v105, 2
    %v107 = vadd.f32 %v105, %v106
    %v108 = vrot.slane %v107, 1
    %v109 = vadd.f32 %v107, %v108
    %v110 = vrot.slane %v64, 4
    %v111 = vadd.f32 %v64, %v110
    %v112 = vrot.slane %v111, 2
    %v113 = vadd.f32 %v111, %v112
    %v114 = vrot.slane %v113, 1
    %v115 = vadd.f32 %v113, %v114
    %v116 = vrot.slane %v65, 4
    %v117 = vadd.f32 %v65, %v116
    %v118 = vrot.slane %v117, 2
    %v119 = vadd.f32 %v117, %v118
    %v120 = vrot.slane %v119, 1
    %v121 = vadd.f32 %v119, %v120
    %v122 = vrot.slane %v66, 4
    %v123 = vadd.f32 %v66, %v122
    %v124 = vrot.slane %v123, 2
    %v125 = vadd.f32 %v123, %v124
    %v126 = vrot.slane %v125, 1
    %v127 = vadd.f32 %v125, %v126
    %v128 = vrot.slane %v67, 4
    %v129 = vadd.f32 %v67, %v128
    %v130 = vrot.slane %v129, 2
    %v131 = vadd.f32 %v129, %v130
    %v132 = vrot.slane %v131, 1
    %v133 = vadd.f32 %v131, %v132
    %v134 = vrot.slane %v68, 4
    %v135 = vadd.f32 %v68, %v134
    %v136 = vrot.slane %v135, 2
    %v137 = vadd.f32 %v135, %v136
    %v138 = vrot.slane %v137, 1
    %v139 = vadd.f32 %v137, %v138
    %v140 = vrot.slane %v69, 4
    %v141 = vadd.f32 %v69, %v140
    %v142 = vrot.slane %v141, 2
    %v143 = vadd.f32 %v141, %v142
    %v144 = vrot.slane %v143, 1
    %v145 = vadd.f32 %v143, %v144
    %v146 = vrot.slane %v70, 4
    %v147 = vadd.f32 %v70, %v146
    %v148 = vrot.slane %v147, 2
    %v149 = vadd.f32 %v147, %v148
    %v150 = vrot.slane %v149, 1
    %v151 = vadd.f32 %v149, %v150
    %v152 = vrot.slane %v71, 4
    %v153 = vadd.f32 %v71, %v152
    %v154 = vrot.slane %v153, 2
    %v155 = vadd.f32 %v153, %v154
    %v156 = vrot.slane %v155, 1
    %v157 = vadd.f32 %v155, %v156
    %v158 = vrot.slane %v72, 4
    %v159 = vadd.f32 %v72, %v158
    %v160 = vrot.slane %v159, 2
    %v161 = vadd.f32 %v159, %v160
    %v162 = vrot.slane %v161, 1
    %v163 = vadd.f32 %v161, %v162
    %v164 = vrot.slane %v73, 4
    %v165 = vadd.f32 %v73, %v164
    %v166 = vrot.slane %v165, 2
    %v167 = vadd.f32 %v165, %v166
    %v168 = vrot.slane %v167, 1
    %v169 = vadd.f32 %v167, %v168
    %v170 = vrot.slane %v74, 4
    %v171 = vadd.f32 %v74, %v170
    %v172 = vrot.slane %v171, 2
    %v173 = vadd.f32 %v171, %v172
    %v174 = vrot.slane %v173, 1
    %v175 = vadd.f32 %v173, %v174
    %v176 = vrot.slane %v75, 4
    %v177 = vadd.f32 %v75, %v176
    %v178 = vrot.slane %v177, 2
    %v179 = vadd.f32 %v177, %v178
    %v180 = vrot.slane %v179, 1
    %v181 = vadd.f32 %v179, %v180
    %v182 = vrot.slane %v76, 4
    %v183 = vadd.f32 %v76, %v182
    %v184 = vrot.slane %v183, 2
    %v185 = vadd.f32 %v183, %v184
    %v186 = vrot.slane %v185, 1
    %v187 = vadd.f32 %v185, %v186
    %v188 = vrot.slane %v77, 4
    %v189 = vadd.f32 %v77, %v188
    %v190 = vrot.slane %v189, 2
    %v191 = vadd.f32 %v189, %v190
    %v192 = vrot.slane %v191, 1
    %v193 = vadd.f32 %v191, %v192
    %v194 = vrot.slane %v78, 4
    %v195 = vadd.f32 %v78, %v194
    %v196 = vrot.slane %v195, 2
    %v197 = vadd.f32 %v195, %v196
    %v198 = vrot.slane %v197, 1
    %v199 = vadd.f32 %v197, %v198
    %v200 = vrot.slane %v79, 4
    %v201 = vadd.f32 %v79, %v200
    %v202 = vrot.slane %v201, 2
    %v203 = vadd.f32 %v201, %v202
    %v204 = vrot.slane %v203, 1
    %v205 = vadd.f32 %v203, %v204
    %v206 = vrot.slane %v80, 4
    %v207 = vadd.f32 %v80, %v206
    %v208 = vrot.slane %v207, 2
    %v209 = vadd.f32 %v207, %v208
    %v210 = vrot.slane %v209, 1
    %v211 = vadd.f32 %v209, %v210
    %v212 = vrot.slane %v81, 4
    %v213 = vadd.f32 %v81, %v212
    %v214 = vrot.slane %v213, 2
    %v215 = vadd.f32 %v213, %v214
    %v216 = vrot.slane %v215, 1
    %v217 = vadd.f32 %v215, %v216
    %v218 = vrot.slane %v82, 4
    %v219 = vadd.f32 %v82, %v218
    %v220 = vrot.slane %v219, 2
    %v221 = vadd.f32 %v219, %v220
    %v222 = vrot.slane %v221, 1
    %v223 = vadd.f32 %v221, %v222
    %v224 = vrot.slane %v83, 4
    %v225 = vadd.f32 %v83, %v224
    %v226 = vrot.slane %v225, 2
    %v227 = vadd.f32 %v225, %v226
    %v228 = vrot.slane %v227, 1
    %v229 = vadd.f32 %v227, %v228
    %v230 = vrot.slane %v84, 4
    %v231 = vadd.f32 %v84, %v230
    %v232 = vrot.slane %v231, 2
    %v233 = vadd.f32 %v231, %v232
    %v234 = vrot.slane %v233, 1
    %v235 = vadd.f32 %v233, %v234
    %v236 = vrot.slane %v85, 4
    %v237 = vadd.f32 %v85, %v236
    %v238 = vrot.slane %v237, 2
    %v239 = vadd.f32 %v237, %v238
    %v240 = vrot.slane %v239, 1
    %v241 = vadd.f32 %v239, %v240
    %v242 = vrot.slane %v86, 4
    %v243 = vadd.f32 %v86, %v242
    %v244 = vrot.slane %v243, 2
    %v245 = vadd.f32 %v243, %v244
    %v246 = vrot.slane %v245, 1
    %v247 = vadd.f32 %v245, %v246
    %v248 = vrot.slane %v87, 4
    %v249 = vadd.f32 %v87, %v248
    %v250 = vrot.slane %v249, 2
    %v251 = vadd.f32 %v249, %v250
    %v252 = vrot.slane %v251, 1
    %v253 = vadd.f32 %v251, %v252
    %v254 = vrot.slane %v88, 4
    %v255 = vadd.f32 %v88, %v254
    %v256 = vrot.slane %v255, 2
    %v257 = vadd.f32 %v255, %v256
    %v258 = vrot.slane %v257, 1
    %v259 = vadd.f32 %v257, %v258
    %v260 = vrot.slane %v89, 4
    %v261 = vadd.f32 %v89, %v260
    %v262 = vrot.slane %v261, 2
    %v263 = vadd.f32 %v261, %v262
    %v264 = vrot.slane %v263, 1
    %v265 = vadd.f32 %v263, %v264
    %v266 = vrot.slane %v90, 4
    %v267 = vadd.f32 %v90, %v266
    %v268 = vrot.slane %v267, 2
    %v269 = vadd.f32 %v267, %v268
    %v270 = vrot.slane %v269, 1
    %v271 = vadd.f32 %v269, %v270
    %v272 = vrot.slane %v91, 4
    %v273 = vadd.f32 %v91, %v272
    %v274 = vrot.slane %v273, 2
    %v275 = vadd.f32 %v273, %v274
    %v276 = vrot.slane %v275, 1
    %v277 = vadd.f32 %v275, %v276
    %v278 = vrot.slane %v92, 4
    %v279 = vadd.f32 %v92, %v278
    %v280 = vrot.slane %v279, 2
    %v281 = vadd.f32 %v279, %v280
    %v282 = vrot.slane %v281, 1
    %v283 = vadd.f32 %v281, %v282
    %v284 = vrot.slane %v93, 4
    %v285 = vadd.f32 %v93, %v284
    %v286 = vrot.slane %v285, 2
    %v287 = vadd.f32 %v285, %v286
    %v288 = vrot.slane %v287, 1
    %v289 = vadd.f32 %v287, %v288
    %vm322 = vcmask 1041409
    %v323 = vsel %vm322, %v127, %v103
    %vm324 = vcmask 1042434
    %v325 = vsel %vm324, %v151, %v323
    %vm326 = vcmask 1043459
    %v327 = vsel %vm326, %v175, %v325
    %vm328 = vcmask 1044484
    %v329 = vsel %vm328, %v199, %v327
    %vm330 = vcmask 1045509
    %v331 = vsel %vm330, %v223, %v329
    %vm332 = vcmask 1046534
    %v333 = vsel %vm332, %v247, %v331
    %vm334 = vcmask 1047559
    %v335 = vsel %vm334, %v271, %v333
    %v336 = vsel %vm322, %v133, %v109
    %v337 = vsel %vm324, %v157, %v336
    %v338 = vsel %vm326, %v181, %v337
    %v339 = vsel %vm328, %v205, %v338
    %v340 = vsel %vm330, %v229, %v339
    %v341 = vsel %vm332, %v253, %v340
    %v342 = vsel %vm334, %v277, %v341
    %v343 = vsel %vm322, %v139, %v115
    %v344 = vsel %vm324, %v163, %v343
    %v345 = vsel %vm326, %v187, %v344
    %v346 = vsel %vm328, %v211, %v345
    %v347 = vsel %vm330, %v235, %v346
    %v348 = vsel %vm332, %v259, %v347
    %v349 = vsel %vm334, %v283, %v348
    %v350 = vsel %vm322, %v145, %v121
    %v351 = vsel %vm324, %v169, %v350
    %v352 = vsel %vm326, %v193, %v351
    %v353 = vsel %vm328, %v217, %v352
    %v354 = vsel %vm330, %v241, %v353
    %v355 = vsel %vm332, %v265, %v354
    %v356 = vsel %vm334, %v289, %v355
    %v361 = vadd.f32 %v94, %v335
    %v362 = vadd.f32 %v95, %v342
    %v363 = vadd.f32 %v96, %v349
    %v364 = vadd.f32 %v97, %v356
    %365 = vst [vmem:[#allocation2] sm:$0xff] %v361
    %366 = vst [vmem:[#allocation2 + $0x8] sm:$0xff] %v362
    %367 = vst [vmem:[#allocation2 + $0x10] sm:$0xff] %v363
    %368 = vst [vmem:[#allocation2 + $0x18] sm:$0xff] %v364
    // Predicated region
    $region30: #{tpu_custom_call.1} parent=1 // pred_check
      %p369 = pneg %p54
    $region31: #{tpu_custom_call.1} parent=1 // pred_check_branch
      %371 = sbr.rel (%p369) target = $region33
    $region32: #{tpu_custom_call.1} parent=1 // pred_region
      %v372 = vld [vmem:[#allocation2] sm:$0xff]
      %v373 = vld [vmem:[#allocation2 + $0x8] sm:$0xff]
      %v374 = vld [vmem:[#allocation2 + $0x10] sm:$0xff]
      %v375 = vld [vmem:[#allocation2 + $0x18] sm:$0xff]
      %v376 = vmul.f32 %v372, 0.125
      %v377 = vmul.f32 %v373, 0.125
      %v378 = vmul.f32 %v374, 0.125
      %v379 = vmul.f32 %v375, 0.125
      %v380 = vld [vmem:[#allocation6] sm:$0xff]
      %v381 = vld [vmem:[#allocation6 + $0x8] sm:$0xff]
      %v382 = vld [vmem:[#allocation6 + $0x10] sm:$0xff]
      %v383 = vld [vmem:[#allocation6 + $0x18] sm:$0xff]
      %v384 = vld [vmem:[#allocation6 + $0x20] sm:$0xff]
      %v385 = vld [vmem:[#allocation6 + $0x28] sm:$0xff]
      %v386 = vld [vmem:[#allocation6 + $0x30] sm:$0xff]
      %v387 = vld [vmem:[#allocation6 + $0x38] sm:$0xff]
      %v388 = vld [vmem:[#allocation6 + $0x40] sm:$0xff]
      %v389 = vld [vmem:[#allocation6 + $0x48] sm:$0xff]
      %v390 = vld [vmem:[#allocation6 + $0x50] sm:$0xff]
      %v391 = vld [vmem:[#allocation6 + $0x58] sm:$0xff]
      %v392 = vld [vmem:[#allocation6 + $0x60] sm:$0xff]
      %v393 = vld [vmem:[#allocation6 + $0x68] sm:$0xff]
      %v394 = vld [vmem:[#allocation6 + $0x70] sm:$0xff]
      %v395 = vld [vmem:[#allocation6 + $0x78] sm:$0xff]
      %v396 = vld [vmem:[#allocation6 + $0x80] sm:$0xff]
      %v397 = vld [vmem:[#allocation6 + $0x88] sm:$0xff]
      %v398 = vld [vmem:[#allocation6 + $0x90] sm:$0xff]
      %v399 = vld [vmem:[#allocation6 + $0x98] sm:$0xff]
      %v400 = vld [vmem:[#allocation6 + $0xa0] sm:$0xff]
      %v401 = vld [vmem:[#allocation6 + $0xa8] sm:$0xff]
      %v402 = vld [vmem:[#allocation6 + $0xb0] sm:$0xff]
      %v403 = vld [vmem:[#allocation6 + $0xb8] sm:$0xff]
      %v404 = vld [vmem:[#allocation6 + $0xc0] sm:$0xff]
      %v405 = vld [vmem:[#allocation6 + $0xc8] sm:$0xff]
      %v406 = vld [vmem:[#allocation6 + $0xd0] sm:$0xff]
      %v407 = vld [vmem:[#allocation6 + $0xd8] sm:$0xff]
      %v408 = vld [vmem:[#allocation6 + $0xe0] sm:$0xff]
      %v409 = vld [vmem:[#allocation6 + $0xe8] sm:$0xff]
      %v410 = vld [vmem:[#allocation6 + $0xf0] sm:$0xff]
      %v411 = vld [vmem:[#allocation6 + $0xf8] sm:$0xff]
      %v412 = vld [vmem:[#allocation6 + $0x100] sm:$0xff]
      %v413 = vld [vmem:[#allocation6 + $0x108] sm:$0xff]
      %v414 = vld [vmem:[#allocation6 + $0x110] sm:$0xff]
      %v415 = vld [vmem:[#allocation6 + $0x118] sm:$0xff]
      %v416 = vld [vmem:[#allocation6 + $0x120] sm:$0xff]
      %v417 = vld [vmem:[#allocation6 + $0x128] sm:$0xff]
      %v418 = vld [vmem:[#allocation6 + $0x130] sm:$0xff]
      %v419 = vld [vmem:[#allocation6 + $0x138] sm:$0xff]
      %v420 = vld [vmem:[#allocation6 + $0x140] sm:$0xff]
      %v421 = vld [vmem:[#allocation6 + $0x148] sm:$0xff]
      %v422 = vld [vmem:[#allocation6 + $0x150] sm:$0xff]
      %v423 = vld [vmem:[#allocation6 + $0x158] sm:$0xff]
      %v424 = vld [vmem:[#allocation6 + $0x160] sm:$0xff]
      %v425 = vld [vmem:[#allocation6 + $0x168] sm:$0xff]
      %v426 = vld [vmem:[#allocation6 + $0x170] sm:$0xff]
      %v427 = vld [vmem:[#allocation6 + $0x178] sm:$0xff]
      %v428 = vld [vmem:[#allocation6 + $0x180] sm:$0xff]
      %v429 = vld [vmem:[#allocation6 + $0x188] sm:$0xff]
      %v430 = vld [vmem:[#allocation6 + $0x190] sm:$0xff]
      %v431 = vld [vmem:[#allocation6 + $0x198] sm:$0xff]
      %v432 = vld [vmem:[#allocation6 + $0x1a0] sm:$0xff]
      %v433 = vld [vmem:[#allocation6 + $0x1a8] sm:$0xff]
      %v434 = vld [vmem:[#allocation6 + $0x1b0] sm:$0xff]
      %v435 = vld [vmem:[#allocation6 + $0x1b8] sm:$0xff]
      %v436 = vld [vmem:[#allocation6 + $0x1c0] sm:$0xff]
      %v437 = vld [vmem:[#allocation6 + $0x1c8] sm:$0xff]
      %v438 = vld [vmem:[#allocation6 + $0x1d0] sm:$0xff]
      %v439 = vld [vmem:[#allocation6 + $0x1d8] sm:$0xff]
      %v440 = vld [vmem:[#allocation6 + $0x1e0] sm:$0xff]
      %v441 = vld [vmem:[#allocation6 + $0x1e8] sm:$0xff]
      %v442 = vld [vmem:[#allocation6 + $0x1f0] sm:$0xff]
      %v443 = vld [vmem:[#allocation6 + $0x1f8] sm:$0xff]
      %v444 = vld [vmem:[#allocation6 + $0x200] sm:$0xff]
      %v445 = vld [vmem:[#allocation6 + $0x208] sm:$0xff]
      %v446 = vld [vmem:[#allocation6 + $0x210] sm:$0xff]
      %v447 = vld [vmem:[#allocation6 + $0x218] sm:$0xff]
      %v448 = vld [vmem:[#allocation6 + $0x220] sm:$0xff]
      %v449 = vld [vmem:[#allocation6 + $0x228] sm:$0xff]
      %v450 = vld [vmem:[#allocation6 + $0x230] sm:$0xff]
      %v451 = vld [vmem:[#allocation6 + $0x238] sm:$0xff]
      %v452 = vld [vmem:[#allocation6 + $0x240] sm:$0xff]
      %v453 = vld [vmem:[#allocation6 + $0x248] sm:$0xff]
      %v454 = vld [vmem:[#allocation6 + $0x250] sm:$0xff]
      %v455 = vld [vmem:[#allocation6 + $0x258] sm:$0xff]
      %v456 = vld [vmem:[#allocation6 + $0x260] sm:$0xff]
      %v457 = vld [vmem:[#allocation6 + $0x268] sm:$0xff]
      %v458 = vld [vmem:[#allocation6 + $0x270] sm:$0xff]
      %v459 = vld [vmem:[#allocation6 + $0x278] sm:$0xff]
      %v460 = vld [vmem:[#allocation6 + $0x280] sm:$0xff]
      %v461 = vld [vmem:[#allocation6 + $0x288] sm:$0xff]
      %v462 = vld [vmem:[#allocation6 + $0x290] sm:$0xff]
      %v463 = vld [vmem:[#allocation6 + $0x298] sm:$0xff]
      %v464 = vld [vmem:[#allocation6 + $0x2a0] sm:$0xff]
      %v465 = vld [vmem:[#allocation6 + $0x2a8] sm:$0xff]
      %v466 = vld [vmem:[#allocation6 + $0x2b0] sm:$0xff]
      %v467 = vld [vmem:[#allocation6 + $0x2b8] sm:$0xff]
      %v468 = vld [vmem:[#allocation6 + $0x2c0] sm:$0xff]
      %v469 = vld [vmem:[#allocation6 + $0x2c8] sm:$0xff]
      %v470 = vld [vmem:[#allocation6 + $0x2d0] sm:$0xff]
      %v471 = vld [vmem:[#allocation6 + $0x2d8] sm:$0xff]
      %v472 = vld [vmem:[#allocation6 + $0x2e0] sm:$0xff]
      %v473 = vld [vmem:[#allocation6 + $0x2e8] sm:$0xff]
      %v474 = vld [vmem:[#allocation6 + $0x2f0] sm:$0xff]
      %v475 = vld [vmem:[#allocation6 + $0x2f8] sm:$0xff]
      %v476 = vld [vmem:[#allocation6 + $0x300] sm:$0xff]
      %v477 = vld [vmem:[#allocation6 + $0x308] sm:$0xff]
      %v478 = vld [vmem:[#allocation6 + $0x310] sm:$0xff]
      %v479 = vld [vmem:[#allocation6 + $0x318] sm:$0xff]
      %v480 = vld [vmem:[#allocation6 + $0x320] sm:$0xff]
      %v481 = vld [vmem:[#allocation6 + $0x328] sm:$0xff]
      %v482 = vld [vmem:[#allocation6 + $0x330] sm:$0xff]
      %v483 = vld [vmem:[#allocation6 + $0x338] sm:$0xff]
      %v484 = vld [vmem:[#allocation6 + $0x340] sm:$0xff]
      %v485 = vld [vmem:[#allocation6 + $0x348] sm:$0xff]
      %v486 = vld [vmem:[#allocation6 + $0x350] sm:$0xff]
      %v487 = vld [vmem:[#allocation6 + $0x358] sm:$0xff]
      %v488 = vld [vmem:[#allocation6 + $0x360] sm:$0xff]
      %v489 = vld [vmem:[#allocation6 + $0x368] sm:$0xff]
      %v490 = vld [vmem:[#allocation6 + $0x370] sm:$0xff]
      %v491 = vld [vmem:[#allocation6 + $0x378] sm:$0xff]
      %v492 = vld [vmem:[#allocation6 + $0x380] sm:$0xff]
      %v493 = vld [vmem:[#allocation6 + $0x388] sm:$0xff]
      %v494 = vld [vmem:[#allocation6 + $0x390] sm:$0xff]
      %v495 = vld [vmem:[#allocation6 + $0x398] sm:$0xff]
      %v496 = vld [vmem:[#allocation6 + $0x3a0] sm:$0xff]
      %v497 = vld [vmem:[#allocation6 + $0x3a8] sm:$0xff]
      %v498 = vld [vmem:[#allocation6 + $0x3b0] sm:$0xff]
      %v499 = vld [vmem:[#allocation6 + $0x3b8] sm:$0xff]
      %v500 = vld [vmem:[#allocation6 + $0x3c0] sm:$0xff]
      %v501 = vld [vmem:[#allocation6 + $0x3c8] sm:$0xff]
      %v502 = vld [vmem:[#allocation6 + $0x3d0] sm:$0xff]
      %v503 = vld [vmem:[#allocation6 + $0x3d8] sm:$0xff]
      %v504 = vld [vmem:[#allocation6 + $0x3e0] sm:$0xff]
      %v505 = vld [vmem:[#allocation6 + $0x3e8] sm:$0xff]
      %v506 = vld [vmem:[#allocation6 + $0x3f0] sm:$0xff]
      %v507 = vld [vmem:[#allocation6 + $0x3f8] sm:$0xff]
      %v508 = vld [vmem:[#allocation6 + $0x400] sm:$0xff]
      %v509 = vld [vmem:[#allocation6 + $0x408] sm:$0xff]
      %v510 = vld [vmem:[#allocation6 + $0x410] sm:$0xff]
      %v511 = vld [vmem:[#allocation6 + $0x418] sm:$0xff]
      %v512 = vld [vmem:[#allocation6 + $0x420] sm:$0xff]
      %v513 = vld [vmem:[#allocation6 + $0x428] sm:$0xff]
      %v514 = vld [vmem:[#allocation6 + $0x430] sm:$0xff]
      %v515 = vld [vmem:[#allocation6 + $0x438] sm:$0xff]
      %v516 = vld [vmem:[#allocation6 + $0x440] sm:$0xff]
      %v517 = vld [vmem:[#allocation6 + $0x448] sm:$0xff]
      %v518 = vld [vmem:[#allocation6 + $0x450] sm:$0xff]
      %v519 = vld [vmem:[#allocation6 + $0x458] sm:$0xff]
      %v520 = vld [vmem:[#allocation6 + $0x460] sm:$0xff]
      %v521 = vld [vmem:[#allocation6 + $0x468] sm:$0xff]
      %v522 = vld [vmem:[#allocation6 + $0x470] sm:$0xff]
      %v523 = vld [vmem:[#allocation6 + $0x478] sm:$0xff]
      %v524 = vld [vmem:[#allocation6 + $0x480] sm:$0xff]
      %v525 = vld [vmem:[#allocation6 + $0x488] sm:$0xff]
      %v526 = vld [vmem:[#allocation6 + $0x490] sm:$0xff]
      %v527 = vld [vmem:[#allocation6 + $0x498] sm:$0xff]
      %v528 = vld [vmem:[#allocation6 + $0x4a0] sm:$0xff]
      %v529 = vld [vmem:[#allocation6 + $0x4a8] sm:$0xff]
      %v530 = vld [vmem:[#allocation6 + $0x4b0] sm:$0xff]
      %v531 = vld [vmem:[#allocation6 + $0x4b8] sm:$0xff]
      %v532 = vld [vmem:[#allocation6 + $0x4c0] sm:$0xff]
      %v533 = vld [vmem:[#allocation6 + $0x4c8] sm:$0xff]
      %v534 = vld [vmem:[#allocation6 + $0x4d0] sm:$0xff]
      %v535 = vld [vmem:[#allocation6 + $0x4d8] sm:$0xff]
      %v536 = vld [vmem:[#allocation6 + $0x4e0] sm:$0xff]
      %v537 = vld [vmem:[#allocation6 + $0x4e8] sm:$0xff]
      %v538 = vld [vmem:[#allocation6 + $0x4f0] sm:$0xff]
      %v539 = vld [vmem:[#allocation6 + $0x4f8] sm:$0xff]
      %v540 = vld [vmem:[#allocation6 + $0x500] sm:$0xff]
      %v541 = vld [vmem:[#allocation6 + $0x508] sm:$0xff]
      %v542 = vld [vmem:[#allocation6 + $0x510] sm:$0xff]
      %v543 = vld [vmem:[#allocation6 + $0x518] sm:$0xff]
      %v544 = vld [vmem:[#allocation6 + $0x520] sm:$0xff]
      %v545 = vld [vmem:[#allocation6 + $0x528] sm:$0xff]
      %v546 = vld [vmem:[#allocation6 + $0x530] sm:$0xff]
      %v547 = vld [vmem:[#allocation6 + $0x538] sm:$0xff]
      %v548 = vld [vmem:[#allocation6 + $0x540] sm:$0xff]
      %v549 = vld [vmem:[#allocation6 + $0x548] sm:$0xff]
      %v550 = vld [vmem:[#allocation6 + $0x550] sm:$0xff]
      %v551 = vld [vmem:[#allocation6 + $0x558] sm:$0xff]
      %v552 = vld [vmem:[#allocation6 + $0x560] sm:$0xff]
      %v553 = vld [vmem:[#allocation6 + $0x568] sm:$0xff]
      %v554 = vld [vmem:[#allocation6 + $0x570] sm:$0xff]
      %v555 = vld [vmem:[#allocation6 + $0x578] sm:$0xff]
      %v556 = vld [vmem:[#allocation6 + $0x580] sm:$0xff]
      %v557 = vld [vmem:[#allocation6 + $0x588] sm:$0xff]
      %v558 = vld [vmem:[#allocation6 + $0x590] sm:$0xff]
      %v559 = vld [vmem:[#allocation6 + $0x598] sm:$0xff]
      %v560 = vld [vmem:[#allocation6 + $0x5a0] sm:$0xff]
      %v561 = vld [vmem:[#allocation6 + $0x5a8] sm:$0xff]
      %v562 = vld [vmem:[#allocation6 + $0x5b0] sm:$0xff]
      %v563 = vld [vmem:[#allocation6 + $0x5b8] sm:$0xff]
      %v564 = vld [vmem:[#allocation6 + $0x5c0] sm:$0xff]
      %v565 = vld [vmem:[#allocation6 + $0x5c8] sm:$0xff]
      %v566 = vld [vmem:[#allocation6 + $0x5d0] sm:$0xff]
      %v567 = vld [vmem:[#allocation6 + $0x5d8] sm:$0xff]
      %v568 = vld [vmem:[#allocation6 + $0x5e0] sm:$0xff]
      %v569 = vld [vmem:[#allocation6 + $0x5e8] sm:$0xff]
      %v570 = vld [vmem:[#allocation6 + $0x5f0] sm:$0xff]
      %v571 = vld [vmem:[#allocation6 + $0x5f8] sm:$0xff]
      %v572 = vld [vmem:[#allocation6 + $0x600] sm:$0xff]
      %v573 = vld [vmem:[#allocation6 + $0x608] sm:$0xff]
      %v574 = vld [vmem:[#allocation6 + $0x610] sm:$0xff]
      %v575 = vld [vmem:[#allocation6 + $0x618] sm:$0xff]
      %v576 = vld [vmem:[#allocation6 + $0x620] sm:$0xff]
      %v577 = vld [vmem:[#allocation6 + $0x628] sm:$0xff]
      %v578 = vld [vmem:[#allocation6 + $0x630] sm:$0xff]
      %v579 = vld [vmem:[#allocation6 + $0x638] sm:$0xff]
      %v580 = vld [vmem:[#allocation6 + $0x640] sm:$0xff]
      %v581 = vld [vmem:[#allocation6 + $0x648] sm:$0xff]
      %v582 = vld [vmem:[#allocation6 + $0x650] sm:$0xff]
      %v583 = vld [vmem:[#allocation6 + $0x658] sm:$0xff]
      %v584 = vld [vmem:[#allocation6 + $0x660] sm:$0xff]
      %v585 = vld [vmem:[#allocation6 + $0x668] sm:$0xff]
      %v586 = vld [vmem:[#allocation6 + $0x670] sm:$0xff]
      %v587 = vld [vmem:[#allocation6 + $0x678] sm:$0xff]
      %v588 = vld [vmem:[#allocation6 + $0x680] sm:$0xff]
      %v589 = vld [vmem:[#allocation6 + $0x688] sm:$0xff]
      %v590 = vld [vmem:[#allocation6 + $0x690] sm:$0xff]
      %v591 = vld [vmem:[#allocation6 + $0x698] sm:$0xff]
      %v592 = vld [vmem:[#allocation6 + $0x6a0] sm:$0xff]
      %v593 = vld [vmem:[#allocation6 + $0x6a8] sm:$0xff]
      %v594 = vld [vmem:[#allocation6 + $0x6b0] sm:$0xff]
      %v595 = vld [vmem:[#allocation6 + $0x6b8] sm:$0xff]
      %v596 = vld [vmem:[#allocation6 + $0x6c0] sm:$0xff]
      %v597 = vld [vmem:[#allocation6 + $0x6c8] sm:$0xff]
      %v598 = vld [vmem:[#allocation6 + $0x6d0] sm:$0xff]
      %v599 = vld [vmem:[#allocation6 + $0x6d8] sm:$0xff]
      %v600 = vld [vmem:[#allocation6 + $0x6e0] sm:$0xff]
      %v601 = vld [vmem:[#allocation6 + $0x6e8] sm:$0xff]
      %v602 = vld [vmem:[#allocation6 + $0x6f0] sm:$0xff]
      %v603 = vld [vmem:[#allocation6 + $0x6f8] sm:$0xff]
      %v604 = vld [vmem:[#allocation6 + $0x700] sm:$0xff]
      %v605 = vld [vmem:[#allocation6 + $0x708] sm:$0xff]
      %v606 = vld [vmem:[#allocation6 + $0x710] sm:$0xff]
      %v607 = vld [vmem:[#allocation6 + $0x718] sm:$0xff]
      %v608 = vld [vmem:[#allocation6 + $0x720] sm:$0xff]
      %v609 = vld [vmem:[#allocation6 + $0x728] sm:$0xff]
      %v610 = vld [vmem:[#allocation6 + $0x730] sm:$0xff]
      %v611 = vld [vmem:[#allocation6 + $0x738] sm:$0xff]
      %v612 = vld [vmem:[#allocation6 + $0x740] sm:$0xff]
      %v613 = vld [vmem:[#allocation6 + $0x748] sm:$0xff]
      %v614 = vld [vmem:[#allocation6 + $0x750] sm:$0xff]
      %v615 = vld [vmem:[#allocation6 + $0x758] sm:$0xff]
      %v616 = vld [vmem:[#allocation6 + $0x760] sm:$0xff]
      %v617 = vld [vmem:[#allocation6 + $0x768] sm:$0xff]
      %v618 = vld [vmem:[#allocation6 + $0x770] sm:$0xff]
      %v619 = vld [vmem:[#allocation6 + $0x778] sm:$0xff]
      %v620 = vld [vmem:[#allocation6 + $0x780] sm:$0xff]
      %v621 = vld [vmem:[#allocation6 + $0x788] sm:$0xff]
      %v622 = vld [vmem:[#allocation6 + $0x790] sm:$0xff]
      %v623 = vld [vmem:[#allocation6 + $0x798] sm:$0xff]
      %v624 = vld [vmem:[#allocation6 + $0x7a0] sm:$0xff]
      %v625 = vld [vmem:[#allocation6 + $0x7a8] sm:$0xff]
      %v626 = vld [vmem:[#allocation6 + $0x7b0] sm:$0xff]
      %v627 = vld [vmem:[#allocation6 + $0x7b8] sm:$0xff]
      %v628 = vld [vmem:[#allocation6 + $0x7c0] sm:$0xff]
      %v629 = vld [vmem:[#allocation6 + $0x7c8] sm:$0xff]
      %v630 = vld [vmem:[#allocation6 + $0x7d0] sm:$0xff]
      %v631 = vld [vmem:[#allocation6 + $0x7d8] sm:$0xff]
      %v632 = vld [vmem:[#allocation6 + $0x7e0] sm:$0xff]
      %v633 = vld [vmem:[#allocation6 + $0x7e8] sm:$0xff]
      %v634 = vld [vmem:[#allocation6 + $0x7f0] sm:$0xff]
      %v635 = vld [vmem:[#allocation6 + $0x7f8] sm:$0xff]
      %v636 = vld [vmem:[#allocation6 + $0x800] sm:$0xff]
      %v637 = vld [vmem:[#allocation6 + $0x808] sm:$0xff]
      %v638 = vld [vmem:[#allocation6 + $0x810] sm:$0xff]
      %v639 = vld [vmem:[#allocation6 + $0x818] sm:$0xff]
      %v640 = vld [vmem:[#allocation6 + $0x820] sm:$0xff]
      %v641 = vld [vmem:[#allocation6 + $0x828] sm:$0xff]
      %v642 = vld [vmem:[#allocation6 + $0x830] sm:$0xff]
      %v643 = vld [vmem:[#allocation6 + $0x838] sm:$0xff]
      %v644 = vld [vmem:[#allocation6 + $0x840] sm:$0xff]
      %v645 = vld [vmem:[#allocation6 + $0x848] sm:$0xff]
      %v646 = vld [vmem:[#allocation6 + $0x850] sm:$0xff]
      %v647 = vld [vmem:[#allocation6 + $0x858] sm:$0xff]
      %v648 = vld [vmem:[#allocation6 + $0x860] sm:$0xff]
      %v649 = vld [vmem:[#allocation6 + $0x868] sm:$0xff]
      %v650 = vld [vmem:[#allocation6 + $0x870] sm:$0xff]
      %v651 = vld [vmem:[#allocation6 + $0x878] sm:$0xff]
      %v652 = vld [vmem:[#allocation6 + $0x880] sm:$0xff]
      %v653 = vld [vmem:[#allocation6 + $0x888] sm:$0xff]
      %v654 = vld [vmem:[#allocation6 + $0x890] sm:$0xff]
      %v655 = vld [vmem:[#allocation6 + $0x898] sm:$0xff]
      %v656 = vld [vmem:[#allocation6 + $0x8a0] sm:$0xff]
      %v657 = vld [vmem:[#allocation6 + $0x8a8] sm:$0xff]
      %v658 = vld [vmem:[#allocation6 + $0x8b0] sm:$0xff]
      %v659 = vld [vmem:[#allocation6 + $0x8b8] sm:$0xff]
      %v660 = vld [vmem:[#allocation6 + $0x8c0] sm:$0xff]
      %v661 = vld [vmem:[#allocation6 + $0x8c8] sm:$0xff]
      %v662 = vld [vmem:[#allocation6 + $0x8d0] sm:$0xff]
      %v663 = vld [vmem:[#allocation6 + $0x8d8] sm:$0xff]
      %v664 = vld [vmem:[#allocation6 + $0x8e0] sm:$0xff]
      %v665 = vld [vmem:[#allocation6 + $0x8e8] sm:$0xff]
      %v666 = vld [vmem:[#allocation6 + $0x8f0] sm:$0xff]
      %v667 = vld [vmem:[#allocation6 + $0x8f8] sm:$0xff]
      %v668 = vld [vmem:[#allocation6 + $0x900] sm:$0xff]
      %v669 = vld [vmem:[#allocation6 + $0x908] sm:$0xff]
      %v670 = vld [vmem:[#allocation6 + $0x910] sm:$0xff]
      %v671 = vld [vmem:[#allocation6 + $0x918] sm:$0xff]
      %v672 = vld [vmem:[#allocation6 + $0x920] sm:$0xff]
      %v673 = vld [vmem:[#allocation6 + $0x928] sm:$0xff]
      %v674 = vld [vmem:[#allocation6 + $0x930] sm:$0xff]
      %v675 = vld [vmem:[#allocation6 + $0x938] sm:$0xff]
      %v676 = vld [vmem:[#allocation6 + $0x940] sm:$0xff]
      %v677 = vld [vmem:[#allocation6 + $0x948] sm:$0xff]
      %v678 = vld [vmem:[#allocation6 + $0x950] sm:$0xff]
      %v679 = vld [vmem:[#allocation6 + $0x958] sm:$0xff]
      %v680 = vld [vmem:[#allocation6 + $0x960] sm:$0xff]
      %v681 = vld [vmem:[#allocation6 + $0x968] sm:$0xff]
      %v682 = vld [vmem:[#allocation6 + $0x970] sm:$0xff]
      %v683 = vld [vmem:[#allocation6 + $0x978] sm:$0xff]
      %v684 = vld [vmem:[#allocation6 + $0x980] sm:$0xff]
      %v685 = vld [vmem:[#allocation6 + $0x988] sm:$0xff]
      %v686 = vld [vmem:[#allocation6 + $0x990] sm:$0xff]
      %v687 = vld [vmem:[#allocation6 + $0x998] sm:$0xff]
      %v688 = vld [vmem:[#allocation6 + $0x9a0] sm:$0xff]
      %v689 = vld [vmem:[#allocation6 + $0x9a8] sm:$0xff]
      %v690 = vld [vmem:[#allocation6 + $0x9b0] sm:$0xff]
      %v691 = vld [vmem:[#allocation6 + $0x9b8] sm:$0xff]
      %v692 = vld [vmem:[#allocation6 + $0x9c0] sm:$0xff]
      %v693 = vld [vmem:[#allocation6 + $0x9c8] sm:$0xff]
      %v694 = vld [vmem:[#allocation6 + $0x9d0] sm:$0xff]
      %v695 = vld [vmem:[#allocation6 + $0x9d8] sm:$0xff]
      %v696 = vld [vmem:[#allocation6 + $0x9e0] sm:$0xff]
      %v697 = vld [vmem:[#allocation6 + $0x9e8] sm:$0xff]
      %v698 = vld [vmem:[#allocation6 + $0x9f0] sm:$0xff]
      %v699 = vld [vmem:[#allocation6 + $0x9f8] sm:$0xff]
      %v700 = vld [vmem:[#allocation6 + $0xa00] sm:$0xff]
      %v701 = vld [vmem:[#allocation6 + $0xa08] sm:$0xff]
      %v702 = vld [vmem:[#allocation6 + $0xa10] sm:$0xff]
      %v703 = vld [vmem:[#allocation6 + $0xa18] sm:$0xff]
      %v704 = vld [vmem:[#allocation6 + $0xa20] sm:$0xff]
      %v705 = vld [vmem:[#allocation6 + $0xa28] sm:$0xff]
      %v706 = vld [vmem:[#allocation6 + $0xa30] sm:$0xff]
      %v707 = vld [vmem:[#allocation6 + $0xa38] sm:$0xff]
      %v708 = vld [vmem:[#allocation6 + $0xa40] sm:$0xff]
      %v709 = vld [vmem:[#allocation6 + $0xa48] sm:$0xff]
      %v710 = vld [vmem:[#allocation6 + $0xa50] sm:$0xff]
      %v711 = vld [vmem:[#allocation6 + $0xa58] sm:$0xff]
      %v712 = vld [vmem:[#allocation6 + $0xa60] sm:$0xff]
      %v713 = vld [vmem:[#allocation6 + $0xa68] sm:$0xff]
      %v714 = vld [vmem:[#allocation6 + $0xa70] sm:$0xff]
      %v715 = vld [vmem:[#allocation6 + $0xa78] sm:$0xff]
      %v716 = vld [vmem:[#allocation6 + $0xa80] sm:$0xff]
      %v717 = vld [vmem:[#allocation6 + $0xa88] sm:$0xff]
      %v718 = vld [vmem:[#allocation6 + $0xa90] sm:$0xff]
      %v719 = vld [vmem:[#allocation6 + $0xa98] sm:$0xff]
      %v720 = vld [vmem:[#allocation6 + $0xaa0] sm:$0xff]
      %v721 = vld [vmem:[#allocation6 + $0xaa8] sm:$0xff]
      %v722 = vld [vmem:[#allocation6 + $0xab0] sm:$0xff]
      %v723 = vld [vmem:[#allocation6 + $0xab8] sm:$0xff]
      %v724 = vld [vmem:[#allocation6 + $0xac0] sm:$0xff]
      %v725 = vld [vmem:[#allocation6 + $0xac8] sm:$0xff]
      %v726 = vld [vmem:[#allocation6 + $0xad0] sm:$0xff]
      %v727 = vld [vmem:[#allocation6 + $0xad8] sm:$0xff]
      %v728 = vld [vmem:[#allocation6 + $0xae0] sm:$0xff]
      %v729 = vld [vmem:[#allocation6 + $0xae8] sm:$0xff]
      %v730 = vld [vmem:[#allocation6 + $0xaf0] sm:$0xff]
      %v731 = vld [vmem:[#allocation6 + $0xaf8] sm:$0xff]
      %v732 = vld [vmem:[#allocation6 + $0xb00] sm:$0xff]
      %v733 = vld [vmem:[#allocation6 + $0xb08] sm:$0xff]
      %v734 = vld [vmem:[#allocation6 + $0xb10] sm:$0xff]
      %v735 = vld [vmem:[#allocation6 + $0xb18] sm:$0xff]
      %v736 = vld [vmem:[#allocation6 + $0xb20] sm:$0xff]
      %v737 = vld [vmem:[#allocation6 + $0xb28] sm:$0xff]
      %v738 = vld [vmem:[#allocation6 + $0xb30] sm:$0xff]
      %v739 = vld [vmem:[#allocation6 + $0xb38] sm:$0xff]
      %v740 = vld [vmem:[#allocation6 + $0xb40] sm:$0xff]
      %v741 = vld [vmem:[#allocation6 + $0xb48] sm:$0xff]
      %v742 = vld [vmem:[#allocation6 + $0xb50] sm:$0xff]
      %v743 = vld [vmem:[#allocation6 + $0xb58] sm:$0xff]
      %v744 = vld [vmem:[#allocation6 + $0xb60] sm:$0xff]
      %v745 = vld [vmem:[#allocation6 + $0xb68] sm:$0xff]
      %v746 = vld [vmem:[#allocation6 + $0xb70] sm:$0xff]
      %v747 = vld [vmem:[#allocation6 + $0xb78] sm:$0xff]
      %v748 = vld [vmem:[#allocation6 + $0xb80] sm:$0xff]
      %v749 = vld [vmem:[#allocation6 + $0xb88] sm:$0xff]
      %v750 = vld [vmem:[#allocation6 + $0xb90] sm:$0xff]
      %v751 = vld [vmem:[#allocation6 + $0xb98] sm:$0xff]
      %v752 = vld [vmem:[#allocation6 + $0xba0] sm:$0xff]
      %v753 = vld [vmem:[#allocation6 + $0xba8] sm:$0xff]
      %v754 = vld [vmem:[#allocation6 + $0xbb0] sm:$0xff]
      %v755 = vld [vmem:[#allocation6 + $0xbb8] sm:$0xff]
      %v756 = vld [vmem:[#allocation6 + $0xbc0] sm:$0xff]
      %v757 = vld [vmem:[#allocation6 + $0xbc8] sm:$0xff]
      %v758 = vld [vmem:[#allocation6 + $0xbd0] sm:$0xff]
      %v759 = vld [vmem:[#allocation6 + $0xbd8] sm:$0xff]
      %v760 = vld [vmem:[#allocation6 + $0xbe0] sm:$0xff]
      %v761 = vld [vmem:[#allocation6 + $0xbe8] sm:$0xff]
      %v762 = vld [vmem:[#allocation6 + $0xbf0] sm:$0xff]
      %v763 = vld [vmem:[#allocation6 + $0xbf8] sm:$0xff]
      %v764 = vld [vmem:[#allocation8] sm:$0x3f]
      %v766 = vlaneseq
      %v767 = vshrl.u32 %v766, 7
      %v768 = vsub.s32 0, %v767
      %v769 = vrot.slane %v764, %v768
      %v770 = vlaneseq
      %v771 = vshrl.u32 %v770, 7
      %v772 = vsub.s32 1, %v771
      %v773 = vrot.slane %v764, %v772
      %v774 = vlaneseq
      %v775 = vshrl.u32 %v774, 7
      %v776 = vsub.s32 2, %v775
      %v777 = vrot.slane %v764, %v776
      %v778 = vlaneseq
      %v779 = vshrl.u32 %v778, 7
      %v780 = vsub.s32 3, %v779
      %v781 = vrot.slane %v764, %v780
      %v782 = vlaneseq
      %v783 = vshrl.u32 %v782, 7
      %v784 = vsub.s32 4, %v783
      %v785 = vrot.slane %v764, %v784
      %v786 = vlaneseq
      %v787 = vshrl.u32 %v786, 7
      %v788 = vsub.s32 5, %v787
      %v789 = vrot.slane %v764, %v788
      %796 = vmatprep.subr.mxu0 %v471
      %797 = vmatpush1.msra.mxu0 %v470
      %798 = vmatprep.subr.mxu0 %v465
      %799 = vmatpush1.msra.mxu0 %v464
      %800 = vmatprep.subr.mxu0 %v459
      %801 = vmatpush1.msra.mxu0 %v458
      %802 = vmatprep.subr.mxu0 %v453
      %803 = vmatpush1.msra.mxu0 %v452
      %804 = vmatprep.subr.mxu0 %v447
      %805 = vmatpush1.msra.mxu0 %v446
      %806 = vmatprep.subr.mxu0 %v441
      %807 = vmatpush1.msra.mxu0 %v440
      %808 = vmatprep.subr.mxu0 %v435
      %809 = vmatpush1.msra.mxu0 %v434
      %810 = vmatprep.subr.mxu0 %v429
      %811 = vmatpush1.msra.mxu0 %v428
      %812 = vmatprep.subr.mxu0 %v423
      %813 = vmatpush1.msra.mxu0 %v422
      %814 = vmatprep.subr.mxu0 %v417
      %815 = vmatpush1.msra.mxu0 %v416
      %816 = vmatprep.subr.mxu0 %v411
      %817 = vmatpush1.msra.mxu0 %v410
      %818 = vmatprep.subr.mxu0 %v405
      %819 = vmatpush1.msra.mxu0 %v404
      %820 = vmatprep.subr.mxu0 %v399
      %821 = vmatpush1.msra.mxu0 %v398
      %822 = vmatprep.subr.mxu0 %v393
      %823 = vmatpush1.msra.mxu0 %v392
      %824 = vmatprep.subr.mxu0 %v387
      %825 = vmatpush1.msra.mxu0 %v386
      %826 = vmatprep.subr.mxu0 %v381
      %827 = vmatpush1.msra.mxu0 %v380
      %828 = vmatprep.subr.mxu0 %v567
      %829 = vmatpush2.msra.mxu0 %v566
      %830 = vmatprep.subr.mxu0 %v561
      %831 = vmatpush2.msra.mxu0 %v560
      %832 = vmatprep.subr.mxu0 %v555
      %833 = vmatpush2.msra.mxu0 %v554
      %834 = vmatprep.subr.mxu0 %v549
      %835 = vmatpush2.msra.mxu0 %v548
      %836 = vmatprep.subr.mxu0 %v543
      %837 = vmatpush2.msra.mxu0 %v542
      %838 = vmatprep.subr.mxu0 %v537
      %839 = vmatpush2.msra.mxu0 %v536
      %840 = vmatprep.subr.mxu0 %v531
      %841 = vmatpush2.msra.mxu0 %v530
      %842 = vmatprep.subr.mxu0 %v525
      %843 = vmatpush2.msra.mxu0 %v524
      %844 = vmatprep.subr.mxu0 %v519
      %845 = vmatpush2.msra.mxu0 %v518
      %846 = vmatprep.subr.mxu0 %v513
      %847 = vmatpush2.msra.mxu0 %v512
      %848 = vmatprep.subr.mxu0 %v507
      %849 = vmatpush2.msra.mxu0 %v506
      %850 = vmatprep.subr.mxu0 %v501
      %851 = vmatpush2.msra.mxu0 %v500
      %852 = vmatprep.subr.mxu0 %v495
      %853 = vmatpush2.msra.mxu0 %v494
      %854 = vmatprep.subr.mxu0 %v489
      %855 = vmatpush2.msra.mxu0 %v488
      %856 = vmatprep.subr.mxu0 %v483
      %857 = vmatpush2.msra.mxu0 %v482
      %858 = vmatprep.subr.mxu0 %v477
      %859 = vmatpush2.msra.mxu0 %v476
      %860 = vmatprep.mubr.f32.mxu0 %v377
      %861 = vmatmul.mubr.f32.gmra.mxu0 %v376
      %v862 = vpop.f32.mrf.mxu0
      %v863 = vadd.f32 %v769, %v862
      %v864 = vpop.f32.mrf.mxu0
      %v865 = vadd.f32 %v773, %v864
      %866 = vdwg.mxu0
      %867 = vmatprep.subr.mxu0 %v663
      %868 = vmatpush1.msra.mxu0 %v662
      %869 = vmatprep.subr.mxu0 %v657
      %870 = vmatpush1.msra.mxu0 %v656
      %871 = vmatprep.subr.mxu0 %v651
      %872 = vmatpush1.msra.mxu0 %v650
      %873 = vmatprep.subr.mxu0 %v645
      %874 = vmatpush1.msra.mxu0 %v644
      %875 = vmatprep.subr.mxu0 %v639
      %876 = vmatpush1.msra.mxu0 %v638
      %877 = vmatprep.subr.mxu0 %v633
      %878 = vmatpush1.msra.mxu0 %v632
      %879 = vmatprep.subr.mxu0 %v627
      %880 = vmatpush1.msra.mxu0 %v626
      %881 = vmatprep.subr.mxu0 %v621
      %882 = vmatpush1.msra.mxu0 %v620
      %883 = vmatprep.subr.mxu0 %v615
      %884 = vmatpush1.msra.mxu0 %v614
      %885 = vmatprep.subr.mxu0 %v609
      %886 = vmatpush1.msra.mxu0 %v608
      %887 = vmatprep.subr.mxu0 %v603
      %888 = vmatpush1.msra.mxu0 %v602
      %889 = vmatprep.subr.mxu0 %v597
      %890 = vmatpush1.msra.mxu0 %v596
      %891 = vmatprep.subr.mxu0 %v591
      %892 = vmatpush1.msra.mxu0 %v590
      %893 = vmatprep.subr.mxu0 %v585
      %894 = vmatpush1.msra.mxu0 %v584
      %895 = vmatprep.subr.mxu0 %v579
      %896 = vmatpush1.msra.mxu0 %v578
      %897 = vmatprep.subr.mxu0 %v573
      %898 = vmatpush1.msra.mxu0 %v572
      %899 = vmatprep.subr.mxu0 %v759
      %900 = vmatpush2.msra.mxu0 %v758
      %901 = vmatprep.subr.mxu0 %v753
      %902 = vmatpush2.msra.mxu0 %v752
      %903 = vmatprep.subr.mxu0 %v747
      %904 = vmatpush2.msra.mxu0 %v746
      %905 = vmatprep.subr.mxu0 %v741
      %906 = vmatpush2.msra.mxu0 %v740
      %907 = vmatprep.subr.mxu0 %v735
      %908 = vmatpush2.msra.mxu0 %v734
      %909 = vmatprep.subr.mxu0 %v729
      %910 = vmatpush2.msra.mxu0 %v728
      %911 = vmatprep.subr.mxu0 %v723
      %912 = vmatpush2.msra.mxu0 %v722
      %913 = vmatprep.subr.mxu0 %v717
      %914 = vmatpush2.msra.mxu0 %v716
      %915 = vmatprep.subr.mxu0 %v711
      %916 = vmatpush2.msra.mxu0 %v710
      %917 = vmatprep.subr.mxu0 %v705
      %918 = vmatpush2.msra.mxu0 %v704
      %919 = vmatprep.subr.mxu0 %v699
      %920 = vmatpush2.msra.mxu0 %v698
      %921 = vmatprep.subr.mxu0 %v693
      %922 = vmatpush2.msra.mxu0 %v692
      %923 = vmatprep.subr.mxu0 %v687
      %924 = vmatpush2.msra.mxu0 %v686
      %925 = vmatprep.subr.mxu0 %v681
      %926 = vmatpush2.msra.mxu0 %v680
      %927 = vmatprep.subr.mxu0 %v675
      %928 = vmatpush2.msra.mxu0 %v674
      %929 = vmatprep.subr.mxu0 %v669
      %930 = vmatpush2.msra.mxu0 %v668
      %931 = vmatprep.mubr.f32.mxu0 %v379
      %932 = vmatmul.mubr.f32.gmra.mxu0 %v378
      %v933 = vpop.f32.mrf.mxu0
      %v934 = vadd.f32 %v863, %v933
      %v935 = vpop.f32.mrf.mxu0
      %v936 = vadd.f32 %v865, %v935
      %937 = vdwg.mxu0
      %938 = vmatprep.subr.mxu0 %v473
      %939 = vmatpush1.msra.mxu0 %v472
      %940 = vmatprep.subr.mxu0 %v467
      %941 = vmatpush1.msra.mxu0 %v466
      %942 = vmatprep.subr.mxu0 %v461
      %943 = vmatpush1.msra.mxu0 %v460
      %944 = vmatprep.subr.mxu0 %v455
      %945 = vmatpush1.msra.mxu0 %v454
      %946 = vmatprep.subr.mxu0 %v449
      %947 = vmatpush1.msra.mxu0 %v448
      %948 = vmatprep.subr.mxu0 %v443
      %949 = vmatpush1.msra.mxu0 %v442
      %950 = vmatprep.subr.mxu0 %v437
      %951 = vmatpush1.msra.mxu0 %v436
      %952 = vmatprep.subr.mxu0 %v431
      %953 = vmatpush1.msra.mxu0 %v430
      %954 = vmatprep.subr.mxu0 %v425
      %955 = vmatpush1.msra.mxu0 %v424
      %956 = vmatprep.subr.mxu0 %v419
      %957 = vmatpush1.msra.mxu0 %v418
      %958 = vmatprep.subr.mxu0 %v413
      %959 = vmatpush1.msra.mxu0 %v412
      %960 = vmatprep.subr.mxu0 %v407
      %961 = vmatpush1.msra.mxu0 %v406
      %962 = vmatprep.subr.mxu0 %v401
      %963 = vmatpush1.msra.mxu0 %v400
      %964 = vmatprep.subr.mxu0 %v395
      %965 = vmatpush1.msra.mxu0 %v394
      %966 = vmatprep.subr.mxu0 %v389
      %967 = vmatpush1.msra.mxu0 %v388
      %968 = vmatprep.subr.mxu0 %v383
      %969 = vmatpush1.msra.mxu0 %v382
      %970 = vmatprep.subr.mxu0 %v569
      %971 = vmatpush2.msra.mxu0 %v568
      %972 = vmatprep.subr.mxu0 %v563
      %973 = vmatpush2.msra.mxu0 %v562
      %974 = vmatprep.subr.mxu0 %v557
      %975 = vmatpush2.msra.mxu0 %v556
      %976 = vmatprep.subr.mxu0 %v551
      %977 = vmatpush2.msra.mxu0 %v550
      %978 = vmatprep.subr.mxu0 %v545
      %979 = vmatpush2.msra.mxu0 %v544
      %980 = vmatprep.subr.mxu0 %v539
      %981 = vmatpush2.msra.mxu0 %v538
      %982 = vmatprep.subr.mxu0 %v533
      %983 = vmatpush2.msra.mxu0 %v532
      %984 = vmatprep.subr.mxu0 %v527
      %985 = vmatpush2.msra.mxu0 %v526
      %986 = vmatprep.subr.mxu0 %v521
      %987 = vmatpush2.msra.mxu0 %v520
      %988 = vmatprep.subr.mxu0 %v515
      %989 = vmatpush2.msra.mxu0 %v514
      %990 = vmatprep.subr.mxu0 %v509
      %991 = vmatpush2.msra.mxu0 %v508
      %992 = vmatprep.subr.mxu0 %v503
      %993 = vmatpush2.msra.mxu0 %v502
      %994 = vmatprep.subr.mxu0 %v497
      %995 = vmatpush2.msra.mxu0 %v496
      %996 = vmatprep.subr.mxu0 %v491
      %997 = vmatpush2.msra.mxu0 %v490
      %998 = vmatprep.subr.mxu0 %v485
      %999 = vmatpush2.msra.mxu0 %v484
      %1000 = vmatprep.subr.mxu0 %v479
      %1001 = vmatpush2.msra.mxu0 %v478
      %1002 = vmatprep.mubr.f32.mxu0 %v377
      %1003 = vmatmul.mubr.f32.gmra.mxu0 %v376
      %v1004 = vpop.f32.mrf.mxu0
      %v1005 = vadd.f32 %v777, %v1004
      %v1006 = vpop.f32.mrf.mxu0
      %v1007 = vadd.f32 %v781, %v1006
      %1008 = vdwg.mxu0
      %1009 = vmatprep.subr.mxu0 %v665
      %1010 = vmatpush1.msra.mxu0 %v664
      %1011 = vmatprep.subr.mxu0 %v659
      %1012 = vmatpush1.msra.mxu0 %v658
      %1013 = vmatprep.subr.mxu0 %v653
      %1014 = vmatpush1.msra.mxu0 %v652
      %1015 = vmatprep.subr.mxu0 %v647
      %1016 = vmatpush1.msra.mxu0 %v646
      %1017 = vmatprep.subr.mxu0 %v641
      %1018 = vmatpush1.msra.mxu0 %v640
      %1019 = vmatprep.subr.mxu0 %v635
      %1020 = vmatpush1.msra.mxu0 %v634
      %1021 = vmatprep.subr.mxu0 %v629
      %1022 = vmatpush1.msra.mxu0 %v628
      %1023 = vmatprep.subr.mxu0 %v623
      %1024 = vmatpush1.msra.mxu0 %v622
      %1025 = vmatprep.subr.mxu0 %v617
      %1026 = vmatpush1.msra.mxu0 %v616
      %1027 = vmatprep.subr.mxu0 %v611
      %1028 = vmatpush1.msra.mxu0 %v610
      %1029 = vmatprep.subr.mxu0 %v605
      %1030 = vmatpush1.msra.mxu0 %v604
      %1031 = vmatprep.subr.mxu0 %v599
      %1032 = vmatpush1.msra.mxu0 %v598
      %1033 = vmatprep.subr.mxu0 %v593
      %1034 = vmatpush1.msra.mxu0 %v592
      %1035 = vmatprep.subr.mxu0 %v587
      %1036 = vmatpush1.msra.mxu0 %v586
      %1037 = vmatprep.subr.mxu0 %v581
      %1038 = vmatpush1.msra.mxu0 %v580
      %1039 = vmatprep.subr.mxu0 %v575
      %1040 = vmatpush1.msra.mxu0 %v574
      %1041 = vmatprep.subr.mxu0 %v761
      %1042 = vmatpush2.msra.mxu0 %v760
      %1043 = vmatprep.subr.mxu0 %v755
      %1044 = vmatpush2.msra.mxu0 %v754
      %1045 = vmatprep.subr.mxu0 %v749
      %1046 = vmatpush2.msra.mxu0 %v748
      %1047 = vmatprep.subr.mxu0 %v743
      %1048 = vmatpush2.msra.mxu0 %v742
      %1049 = vmatprep.subr.mxu0 %v737
      %1050 = vmatpush2.msra.mxu0 %v736
      %1051 = vmatprep.subr.mxu0 %v731
      %1052 = vmatpush2.msra.mxu0 %v730
      %1053 = vmatprep.subr.mxu0 %v725
      %1054 = vmatpush2.msra.mxu0 %v724
      %1055 = vmatprep.subr.mxu0 %v719
      %1056 = vmatpush2.msra.mxu0 %v718
      %1057 = vmatprep.subr.mxu0 %v713
      %1058 = vmatpush2.msra.mxu0 %v712
      %1059 = vmatprep.subr.mxu0 %v707
      %1060 = vmatpush2.msra.mxu0 %v706
      %1061 = vmatprep.subr.mxu0 %v701
      %1062 = vmatpush2.msra.mxu0 %v700
      %1063 = vmatprep.subr.mxu0 %v695
      %1064 = vmatpush2.msra.mxu0 %v694
      %1065 = vmatprep.subr.mxu0 %v689
      %1066 = vmatpush2.msra.mxu0 %v688
      %1067 = vmatprep.subr.mxu0 %v683
      %1068 = vmatpush2.msra.mxu0 %v682
      %1069 = vmatprep.subr.mxu0 %v677
      %1070 = vmatpush2.msra.mxu0 %v676
      %1071 = vmatprep.subr.mxu0 %v671
      %1072 = vmatpush2.msra.mxu0 %v670
      %1073 = vmatprep.mubr.f32.mxu0 %v379
      %1074 = vmatmul.mubr.f32.gmra.mxu0 %v378
      %v1075 = vpop.f32.mrf.mxu0
      %v1076 = vadd.f32 %v1005, %v1075
      %v1077 = vpop.f32.mrf.mxu0
      %v1078 = vadd.f32 %v1007, %v1077
      %1079 = vdwg.mxu0
      %1080 = vmatprep.subr.mxu0 %v475
      %1081 = vmatpush1.msra.mxu0 %v474
      %1082 = vmatprep.subr.mxu0 %v469
      %1083 = vmatpush1.msra.mxu0 %v468
      %1084 = vmatprep.subr.mxu0 %v463
      %1085 = vmatpush1.msra.mxu0 %v462
      %1086 = vmatprep.subr.mxu0 %v457
      %1087 = vmatpush1.msra.mxu0 %v456
      %1088 = vmatprep.subr.mxu0 %v451
      %1089 = vmatpush1.msra.mxu0 %v450
      %1090 = vmatprep.subr.mxu0 %v445
      %1091 = vmatpush1.msra.mxu0 %v444
      %1092 = vmatprep.subr.mxu0 %v439
      %1093 = vmatpush1.msra.mxu0 %v438
      %1094 = vmatprep.subr.mxu0 %v433
      %1095 = vmatpush1.msra.mxu0 %v432
      %1096 = vmatprep.subr.mxu0 %v427
      %1097 = vmatpush1.msra.mxu0 %v426
      %1098 = vmatprep.subr.mxu0 %v421
      %1099 = vmatpush1.msra.mxu0 %v420
      %1100 = vmatprep.subr.mxu0 %v415
      %1101 = vmatpush1.msra.mxu0 %v414
      %1102 = vmatprep.subr.mxu0 %v409
      %1103 = vmatpush1.msra.mxu0 %v408
      %1104 = vmatprep.subr.mxu0 %v403
      %1105 = vmatpush1.msra.mxu0 %v402
      %1106 = vmatprep.subr.mxu0 %v397
      %1107 = vmatpush1.msra.mxu0 %v396
      %1108 = vmatprep.subr.mxu0 %v391
      %1109 = vmatpush1.msra.mxu0 %v390
      %1110 = vmatprep.subr.mxu0 %v385
      %1111 = vmatpush1.msra.mxu0 %v384
      %1112 = vmatprep.subr.mxu0 %v571
      %1113 = vmatpush2.msra.mxu0 %v570
      %1114 = vmatprep.subr.mxu0 %v565
      %1115 = vmatpush2.msra.mxu0 %v564
      %1116 = vmatprep.subr.mxu0 %v559
      %1117 = vmatpush2.msra.mxu0 %v558
      %1118 = vmatprep.subr.mxu0 %v553
      %1119 = vmatpush2.msra.mxu0 %v552
      %1120 = vmatprep.subr.mxu0 %v547
      %1121 = vmatpush2.msra.mxu0 %v546
      %1122 = vmatprep.subr.mxu0 %v541
      %1123 = vmatpush2.msra.mxu0 %v540
      %1124 = vmatprep.subr.mxu0 %v535
      %1125 = vmatpush2.msra.mxu0 %v534
      %1126 = vmatprep.subr.mxu0 %v529
      %1127 = vmatpush2.msra.mxu0 %v528
      %1128 = vmatprep.subr.mxu0 %v523
      %1129 = vmatpush2.msra.mxu0 %v522
      %1130 = vmatprep.subr.mxu0 %v517
      %1131 = vmatpush2.msra.mxu0 %v516
      %1132 = vmatprep.subr.mxu0 %v511
      %1133 = vmatpush2.msra.mxu0 %v510
      %1134 = vmatprep.subr.mxu0 %v505
      %1135 = vmatpush2.msra.mxu0 %v504
      %1136 = vmatprep.subr.mxu0 %v499
      %1137 = vmatpush2.msra.mxu0 %v498
      %1138 = vmatprep.subr.mxu0 %v493
      %1139 = vmatpush2.msra.mxu0 %v492
      %1140 = vmatprep.subr.mxu0 %v487
      %1141 = vmatpush2.msra.mxu0 %v486
      %1142 = vmatprep.subr.mxu0 %v481
      %1143 = vmatpush2.msra.mxu0 %v480
      %1144 = vmatprep.mubr.f32.mxu0 %v377
      %1145 = vmatmul.mubr.f32.gmra.mxu0 %v376
      %v1146 = vpop.f32.mrf.mxu0
      %v1147 = vadd.f32 %v785, %v1146
      %v1148 = vpop.f32.mrf.mxu0
      %v1149 = vadd.f32 %v789, %v1148
      %1150 = vdwg.mxu0
      %1151 = vmatprep.subr.mxu0 %v667
      %1152 = vmatpush1.msra.mxu0 %v666
      %1153 = vmatprep.subr.mxu0 %v661
      %1154 = vmatpush1.msra.mxu0 %v660
      %1155 = vmatprep.subr.mxu0 %v655
      %1156 = vmatpush1.msra.mxu0 %v654
      %1157 = vmatprep.subr.mxu0 %v649
      %1158 = vmatpush1.msra.mxu0 %v648
      %1159 = vmatprep.subr.mxu0 %v643
      %1160 = vmatpush1.msra.mxu0 %v642
      %1161 = vmatprep.subr.mxu0 %v637
      %1162 = vmatpush1.msra.mxu0 %v636
      %1163 = vmatprep.subr.mxu0 %v631
      %1164 = vmatpush1.msra.mxu0 %v630
      %1165 = vmatprep.subr.mxu0 %v625
      %1166 = vmatpush1.msra.mxu0 %v624
      %1167 = vmatprep.subr.mxu0 %v619
      %1168 = vmatpush1.msra.mxu0 %v618
      %1169 = vmatprep.subr.mxu0 %v613
      %1170 = vmatpush1.msra.mxu0 %v612
      %1171 = vmatprep.subr.mxu0 %v607
      %1172 = vmatpush1.msra.mxu0 %v606
      %1173 = vmatprep.subr.mxu0 %v601
      %1174 = vmatpush1.msra.mxu0 %v600
      %1175 = vmatprep.subr.mxu0 %v595
      %1176 = vmatpush1.msra.mxu0 %v594
      %1177 = vmatprep.subr.mxu0 %v589
      %1178 = vmatpush1.msra.mxu0 %v588
      %1179 = vmatprep.subr.mxu0 %v583
      %1180 = vmatpush1.msra.mxu0 %v582
      %1181 = vmatprep.subr.mxu0 %v577
      %1182 = vmatpush1.msra.mxu0 %v576
      %1183 = vmatprep.subr.mxu0 %v763
      %1184 = vmatpush2.msra.mxu0 %v762
      %1185 = vmatprep.subr.mxu0 %v757
      %1186 = vmatpush2.msra.mxu0 %v756
      %1187 = vmatprep.subr.mxu0 %v751
      %1188 = vmatpush2.msra.mxu0 %v750
      %1189 = vmatprep.subr.mxu0 %v745
      %1190 = vmatpush2.msra.mxu0 %v744
      %1191 = vmatprep.subr.mxu0 %v739
      %1192 = vmatpush2.msra.mxu0 %v738
      %1193 = vmatprep.subr.mxu0 %v733
      %1194 = vmatpush2.msra.mxu0 %v732
      %1195 = vmatprep.subr.mxu0 %v727
      %1196 = vmatpush2.msra.mxu0 %v726
      %1197 = vmatprep.subr.mxu0 %v721
      %1198 = vmatpush2.msra.mxu0 %v720
      %1199 = vmatprep.subr.mxu0 %v715
      %1200 = vmatpush2.msra.mxu0 %v714
      %1201 = vmatprep.subr.mxu0 %v709
      %1202 = vmatpush2.msra.mxu0 %v708
      %1203 = vmatprep.subr.mxu0 %v703
      %1204 = vmatpush2.msra.mxu0 %v702
      %1205 = vmatprep.subr.mxu0 %v697
      %1206 = vmatpush2.msra.mxu0 %v696
      %1207 = vmatprep.subr.mxu0 %v691
      %1208 = vmatpush2.msra.mxu0 %v690
      %1209 = vmatprep.subr.mxu0 %v685
      %1210 = vmatpush2.msra.mxu0 %v684
      %1211 = vmatprep.subr.mxu0 %v679
      %1212 = vmatpush2.msra.mxu0 %v678
      %1213 = vmatprep.subr.mxu0 %v673
      %1214 = vmatpush2.msra.mxu0 %v672
      %1215 = vmatprep.mubr.f32.mxu0 %v379
      %1216 = vmatmul.mubr.f32.gmra.mxu0 %v378
      %v1217 = vpop.f32.mrf.mxu0
      %v1218 = vadd.f32 %v1147, %v1217
      %v1219 = vpop.f32.mrf.mxu0
      %v1220 = vadd.f32 %v1149, %v1219
      %1221 = vdwg.mxu0
      %v1228 = vcombine.low %v934, %v936
      %v1229 = vcombine.high %v934, %v936
      %v1230 = vcombine.low %v1076, %v1078
      %v1231 = vcombine.high %v1076, %v1078
      %v1233 = vunpack.c.l.s4 1983009808
      %v1234 = vunpack.c.0.s8 %v1233
      %v1235 = vlaneseq
      %v1236 = vshrl.u32 %v1235, 7
      %v1237 = vsub.s32 %v1234, %v1236
      %v1238 = vrot.slane %v1228, %v1237
      %v1240 = vunpack.c.l.s4 1983009808
      %v1241 = vunpack.c.0.s8 %v1240
      %v1242 = vlaneseq
      %v1243 = vshrl.u32 %v1242, 7
      %v1244 = vsub.s32 %v1241, %v1243
      %v1245 = vrot.slane %v1229, %v1244
      %v1247 = vunpack.c.l.s4 1983009808
      %v1248 = vunpack.c.0.s8 %v1247
      %v1249 = vlaneseq
      %v1250 = vshrl.u32 %v1249, 7
      %v1251 = vsub.s32 %v1248, %v1250
      %v1252 = vrot.slane %v1230, %v1251
      %v1254 = vunpack.c.l.s4 1983009808
      %v1255 = vunpack.c.0.s8 %v1254
      %v1256 = vlaneseq
      %v1257 = vshrl.u32 %v1256, 7
      %v1258 = vsub.s32 %v1255, %v1257
      %v1259 = vrot.slane %v1231, %v1258
      %v1260 = vcombine.low %v1238, %v1252
      %v1261 = vcombine.high %v1238, %v1252
      %v1262 = vcombine.low %v1245, %v1259
      %v1263 = vcombine.high %v1245, %v1259
      %v1264 = vcombine.low %v1218, %v1220
      %v1265 = vcombine.high %v1218, %v1220
      %v1267 = vunpack.c.l.s4 1983009808
      %v1268 = vunpack.c.0.s8 %v1267
      %v1269 = vlaneseq
      %v1270 = vshrl.u32 %v1269, 7
      %v1271 = vsub.s32 %v1268, %v1270
      %v1272 = vrot.slane %v1264, %v1271
      %v1274 = vunpack.c.l.s4 1983009808
      %v1275 = vunpack.c.0.s8 %v1274
      %v1276 = vlaneseq
      %v1277 = vshrl.u32 %v1276, 7
      %v1278 = vsub.s32 %v1275, %v1277
      %v1279 = vrot.slane %v1265, %v1278
      %v1280 = vcombine.high %v1272, %v1272
      %v1281 = vcombine.high %v1279, %v1279
      %1290 = vst [vmem:[#allocation9] sm:$0xff] %v1260
      %1291 = vst [vmem:[#allocation9 + $0x8] sm:$0xf] %v1272
      %1292 = vst [vmem:[#allocation9 + $0xc] sm:$0xff] %v1261
      %1293 = vst [vmem:[#allocation9 + $0x14] sm:$0xf] %v1280
      %1294 = vst [vmem:[#allocation9 + $0x18] sm:$0xff] %v1262
      %1295 = vst [vmem:[#allocation9 + $0x20] sm:$0xf] %v1279
      %1296 = vst [vmem:[#allocation9 + $0x24] sm:$0xff] %v1263
      %1297 = vst [vmem:[#allocation9 + $0x2c] sm:$0xf] %v1281
    $region33: #{tpu_custom_call.1} parent=1 // pred_fallthru
      _
    // Predicated region
    $region34: #{tpu_custom_call.1} parent=1 // pred_check
      _
    $region35: #{tpu_custom_call.1} parent=1 // pred_check_branch
      %1299 = sbr.rel (0) target = $region37
    $region36: #{tpu_custom_call.1} parent=1 // pred_region
      %s1301 = ssub.s32 768, 192
      %1302 = vsyncadd [#allocation5], %s1301
      %s1303 = sshll.u32 [#allocation9], 4
      %s1304 = int_to_ptr.vmem [resolvable:$true] %s1303
      %1309 = dma.vmem_to_hbm [thread:$0]  %s1304, 192, %s3, [#allocation5], 192, 192, 12
    $region37: #{tpu_custom_call.1} parent=1 // pred_fallthru
      _
    // Predicated region
    $region38: #{tpu_custom_call.1} parent=1 // pred_check
      _
    $region39: #{tpu_custom_call.1} parent=1 // pred_check_branch
      %1311 = sbr.rel (0) target = $region41
    $region40: #{tpu_custom_call.1} parent=1 // pred_region
      %1312 = dma.done [#allocation5], 768
    $region41: #{tpu_custom_call.1} parent=1 // pred_fallthru
      _
    %1313 = vsyncpa [#allocation4], 1
    %1314 = vsyncpa [#allocation7], 1
    %1315 = vsyncpa [#allocation5], 1

</llo_original>
